<compile_context>
chip_gen: v7x
topology: tpu7x:2x2x1
jax: 0.10.0
libtpu: 0.0.40
codegen_flags: <defaults>
</compile_context>

<pallas_src>
import math

import jax
import jax.numpy as jnp
from jax.experimental import pallas as pl
from jax.experimental.pallas import tpu as pltpu

FEAT_DIM = 641      # mlp input
MLP_OUT = 16        # mlp output
Z_DIM = 18          # z features (34 - 16)
HID = 64            # hidden of "model"
OUT = 1             # final output

TILE_B_DEFAULT = 4096


def _round_up(x, m):
    return ((x + m - 1) // m) * m


def hybride_kernel(feat_ref, z_ref,
                   w1_ref, b1_ref,
                   w2y_ref, w2z_ref, b2_ref,
                   w3t_ref, b3_ref,
                   out_ref):
    # --- self.mlp: Linear(641, 16) + ReLU, bf16 MXU with f32 accumulation ---
    feat = feat_ref[...]                                   # [tb, 641]
    if feat.dtype != jnp.bfloat16:                         # static trace-time branch
        feat = feat.astype(jnp.bfloat16)
    w1 = w1_ref[...]
    if w1.dtype != jnp.bfloat16:
        w1 = w1.astype(jnp.bfloat16)
    y = jnp.dot(feat, w1, preferred_element_type=jnp.float32) + b1_ref[...]
    y = jnp.maximum(y, 0.0)                                # [tb, 16] f32

    # --- f = cat([y, z], axis=1); Linear(34, 64) + ReLU ---
    # concat fused away: cat([y, z]) @ W2 == y @ W2[:16] + z @ W2[16:]
    z = z_ref[...].astype(jnp.float32)                     # [tb, 18]
    h = (jnp.dot(y, w2y_ref[...], preferred_element_type=jnp.float32)
         + jnp.dot(z, w2z_ref[...], preferred_element_type=jnp.float32)
         + b2_ref[...])
    h = jnp.maximum(h, 0.0)                                # [tb, 64] f32

    # --- final Linear(64, 1), lane-dense: out[o, b] = sum_h w3t[o, h] * h[b, h] ---
    # Tiny (1 x 64 x tb) contraction; any implied transpose of h is VMEM-local.
    r = jnp.einsum('oh,bh->ob', w3t_ref[...], h,
                   preferred_element_type=jnp.float32)     # [1, tb]
    out_ref[...] = r + b3_ref[...]                         # b3 is (1, 1), broadcasts


def hybride_forward(features, z, params, *, tile_b=TILE_B_DEFAULT):
    """features: [B, 641] (bf16 preferred, f32 ok), z: [B, 18] f32 -> [B, 1] f32."""
    w1, b1, w2y, w2z, b2, w3t, b3 = params
    B = features.shape[0]

    # Tile: multiple of 128 (lane-dense output / sublane alignment), capped at tile_b.
    tile_b = max(128, _round_up(tile_b, 128))
    tb = min(tile_b, _round_up(B, 128))
    n_tiles = pl.cdiv(B, tb)
    Bp_out = n_tiles * tb          # output padded only (few KB); inputs NOT padded.

    flops = 2 * B * (FEAT_DIM * MLP_OUT + (MLP_OUT + Z_DIM) * HID + HID * OUT)
    weight_bytes = sum(int(p.size) * p.dtype.itemsize for p in params)
    bytes_accessed = (B * FEAT_DIM * features.dtype.itemsize
                      + B * Z_DIM * z.dtype.itemsize
                      + B * OUT * 4
                      + weight_bytes)

    const = lambda i: (0, 0)
    out_row = pl.pallas_call(
        hybride_kernel,
        out_shape=jax.ShapeDtypeStruct((1, Bp_out), jnp.float32),
        grid=(n_tiles,),
        in_specs=[
            pl.BlockSpec((tb, FEAT_DIM), lambda i: (i, 0)),   # features, streamed
            pl.BlockSpec((tb, Z_DIM), lambda i: (i, 0)),      # z, streamed
            pl.BlockSpec((FEAT_DIM, MLP_OUT), const),         # w1 (resident, bf16)
            pl.BlockSpec((1, MLP_OUT), const),                # b1
            pl.BlockSpec((MLP_OUT, HID), const),              # w2[:16]
            pl.BlockSpec((Z_DIM, HID), const),                # w2[16:]
            pl.BlockSpec((1, HID), const),                    # b2
            pl.BlockSpec((OUT, HID), const),                  # w3ᵀ
            pl.BlockSpec((1, OUT), const),                    # b3
        ],
        out_specs=pl.BlockSpec((1, tb), lambda i: (0, i)),    # lane-dense output row
        compiler_params=pltpu.CompilerParams(
            dimension_semantics=("parallel",),
            vmem_limit_bytes=48 << 20,
        ),
        cost_estimate=pl.CostEstimate(
            flops=flops, transcendentals=0, bytes_accessed=bytes_accessed),
    )(features, z, w1, b1, w2y, w2z, b2, w3t, b3)

    return out_row[0, :B].reshape(B, OUT)


def _torch_linear_init(key, fan_in, fan_out):
    """Deterministic PyTorch-style Linear init: U(-1/sqrt(fan_in), 1/sqrt(fan_in))."""
    kw, kb = jax.random.split(key)
    bound = 1.0 / math.sqrt(fan_in)
    w = jax.random.uniform(kw, (fan_in, fan_out), jnp.float32, -bound, bound)
    b = jax.random.uniform(kb, (1, fan_out), jnp.float32, -bound, bound)
    return w, b


def make_params(key):
    k1, k2, k3 = jax.random.split(key, 3)
    w1, b1 = _torch_linear_init(k1, FEAT_DIM, MLP_OUT)          # Linear(641, 16)
    w2, b2 = _torch_linear_init(k2, MLP_OUT + Z_DIM, HID)       # Linear(34, 64)
    w3, b3 = _torch_linear_init(k3, HID, OUT)                   # Linear(64, 1)
    w2y, w2z = w2[:MLP_OUT], w2[MLP_OUT:]                       # split for fused concat
    w3t = w3.T                                                  # [1, 64] for lane-dense out
    # w1 stored bf16: halves the resident-weight DMA and feeds the bf16 MXU path
    # directly (bf16 x bf16 products are exact in the f32 accumulator).
    return (w1.astype(jnp.bfloat16), b1, w2y, w2z, b2, w3t, b3)


def reference_forward(features, z, params):
    """Mirrors the kernel numerics (bf16-rounded features/w1, f32 math elsewhere)."""
    w1, b1, w2y, w2z, b2, w3t, b3 = params
    hp = jax.lax.Precision.HIGHEST
    feat = features.astype(jnp.bfloat16).astype(jnp.float32)
    w1f = w1.astype(jnp.float32)
    y = jnp.maximum(jnp.dot(feat, w1f, precision=hp) + b1, 0.0)
    zf = z.astype(jnp.float32)
    h = jnp.maximum(jnp.dot(y, w2y, precision=hp)
                    + jnp.dot(zf, w2z, precision=hp) + b2, 0.0)
    return jnp.dot(h, w3t.T, precision=hp) + b3


if __name__ == "__main__":
    key = jax.random.PRNGKey(0)
    kf, kz, kp = jax.random.split(key, 3)
    params = make_params(kp)

    # Test 1: tiny batch, bf16-streamed features (the intended fast path).
    B = 2
    features = jax.random.normal(kf, (B, FEAT_DIM), jnp.float32).astype(jnp.bfloat16)
    z = jax.random.normal(kz, (B, Z_DIM), jnp.float32)
    out = jax.block_until_ready(hybride_forward(features, z, params))
    ref = reference_forward(features, z, params)
    assert out.shape == (B, OUT)
    err = float(jnp.max(jnp.abs(out - ref)))
    assert err < 1e-2, f"max abs err {err}"

    # Test 2: ragged multi-tile batch (grid > 1, B not a multiple of the tile),
    #         f32 features exercising the in-kernel bf16 cast path.
    B2 = 300
    features2 = jax.random.normal(kf, (B2, FEAT_DIM), jnp.float32)
    z2 = jax.random.normal(kz, (B2, Z_DIM), jnp.float32)
    out2 = jax.block_until_ready(hybride_forward(features2, z2, params, tile_b=128))
    ref2 = reference_forward(features2, z2, params)
    assert out2.shape == (B2, OUT)
    err2 = float(jnp.max(jnp.abs(out2 - ref2)))
    assert err2 < 1e-2, f"max abs err {err2}"

    print("KERNEL_OK")
</pallas_src>

<mosaic_0001>
module attributes {stable_mosaic.version = 11 : i64} {
  func.func @hybride_kernel(%arg0: i32, %arg1: memref<128x641xbf16, #tpu.memory_space<vmem>>, %arg2: memref<128x18xf32, #tpu.memory_space<vmem>>, %arg3: memref<641x16xbf16, #tpu.memory_space<vmem>>, %arg4: memref<1x16xf32, #tpu.memory_space<vmem>>, %arg5: memref<16x64xf32, #tpu.memory_space<vmem>>, %arg6: memref<18x64xf32, #tpu.memory_space<vmem>>, %arg7: memref<1x64xf32, #tpu.memory_space<vmem>>, %arg8: memref<1x64xf32, #tpu.memory_space<vmem>>, %arg9: memref<1x1xf32, #tpu.memory_space<vmem>>, %arg10: memref<1x128xf32, #tpu.memory_space<vmem>>) attributes {dimension_semantics = [#tpu.dimension_semantics<parallel>], iteration_bounds = array<i64: 1>, scalar_prefetch = 0 : i64, scratch_operands = 0 : i64, tpu.core_type = #tpu.core_type<tc>, window_params = [{transform_indices = @transform_0, window_bounds = array<i64: 128, 641>}, {transform_indices = @transform_1, window_bounds = array<i64: 128, 18>}, {pipeline_mode = #tpu.pipeline_mode<synchronous>, transform_indices = @transform_2, window_bounds = array<i64: 641, 16>}, {pipeline_mode = #tpu.pipeline_mode<synchronous>, transform_indices = @transform_3, window_bounds = array<i64: 1, 16>}, {pipeline_mode = #tpu.pipeline_mode<synchronous>, transform_indices = @transform_4, window_bounds = array<i64: 16, 64>}, {pipeline_mode = #tpu.pipeline_mode<synchronous>, transform_indices = @transform_5, window_bounds = array<i64: 18, 64>}, {pipeline_mode = #tpu.pipeline_mode<synchronous>, transform_indices = @transform_6, window_bounds = array<i64: 1, 64>}, {pipeline_mode = #tpu.pipeline_mode<synchronous>, transform_indices = @transform_7, window_bounds = array<i64: 1, 64>}, {pipeline_mode = #tpu.pipeline_mode<synchronous>, transform_indices = @transform_8, window_bounds = array<i64: 1, 1>}, {transform_indices = @transform_9, window_bounds = array<i64: 1, 128>}]} {
    %c0 = arith.constant 0 : index
    %c0_0 = arith.constant 0 : index
    %0 = vector.load %arg1[%c0, %c0_0] : memref<128x641xbf16, #tpu.memory_space<vmem>>, vector<128x641xbf16>
    %c0_1 = arith.constant 0 : index
    %c0_2 = arith.constant 0 : index
    %1 = vector.load %arg3[%c0_1, %c0_2] : memref<641x16xbf16, #tpu.memory_space<vmem>>, vector<641x16xbf16>
    %cst = arith.constant dense<0.000000e+00> : vector<128x16xf32>
    %2 = tpu.matmul %0, %1, %cst {dimension_numbers = #tpu.dot_dimension_numbers<[1], [0], [0], [1], [0, 0, 1, 1], [], []>} : vector<128x641xbf16>, vector<641x16xbf16>, vector<128x16xf32> -> vector<128x16xf32>
    %c0_3 = arith.constant 0 : index
    %c0_4 = arith.constant 0 : index
    %3 = vector.load %arg4[%c0_3, %c0_4] : memref<1x16xf32, #tpu.memory_space<vmem>>, vector<1x16xf32>
    %4 = vector.broadcast %3 : vector<1x16xf32> to vector<128x16xf32>
    %5 = arith.addf %2, %4 : vector<128x16xf32>
    %cst_5 = arith.constant 0.000000e+00 : f32
    %6 = vector.broadcast %cst_5 : f32 to vector<128x16xf32>
    %7 = arith.maximumf %5, %6 : vector<128x16xf32>
    %c0_6 = arith.constant 0 : index
    %c0_7 = arith.constant 0 : index
    %8 = vector.load %arg2[%c0_6, %c0_7] : memref<128x18xf32, #tpu.memory_space<vmem>>, vector<128x18xf32>
    %c0_8 = arith.constant 0 : index
    %c0_9 = arith.constant 0 : index
    %9 = vector.load %arg5[%c0_8, %c0_9] : memref<16x64xf32, #tpu.memory_space<vmem>>, vector<16x64xf32>
    %cst_10 = arith.constant dense<0.000000e+00> : vector<128x64xf32>
    %10 = tpu.matmul %7, %9, %cst_10 {dimension_numbers = #tpu.dot_dimension_numbers<[1], [0], [0], [1], [0, 0, 1, 1], [], []>} : vector<128x16xf32>, vector<16x64xf32>, vector<128x64xf32> -> vector<128x64xf32>
    %c0_11 = arith.constant 0 : index
    %c0_12 = arith.constant 0 : index
    %11 = vector.load %arg6[%c0_11, %c0_12] : memref<18x64xf32, #tpu.memory_space<vmem>>, vector<18x64xf32>
    %cst_13 = arith.constant dense<0.000000e+00> : vector<128x64xf32>
    %12 = tpu.matmul %8, %11, %cst_13 {dimension_numbers = #tpu.dot_dimension_numbers<[1], [0], [0], [1], [0, 0, 1, 1], [], []>} : vector<128x18xf32>, vector<18x64xf32>, vector<128x64xf32> -> vector<128x64xf32>
    %13 = arith.addf %10, %12 : vector<128x64xf32>
    %c0_14 = arith.constant 0 : index
    %c0_15 = arith.constant 0 : index
    %14 = vector.load %arg7[%c0_14, %c0_15] : memref<1x64xf32, #tpu.memory_space<vmem>>, vector<1x64xf32>
    %15 = vector.broadcast %14 : vector<1x64xf32> to vector<128x64xf32>
    %16 = arith.addf %13, %15 : vector<128x64xf32>
    %cst_16 = arith.constant 0.000000e+00 : f32
    %17 = vector.broadcast %cst_16 : f32 to vector<128x64xf32>
    %18 = arith.maximumf %16, %17 : vector<128x64xf32>
    %c0_17 = arith.constant 0 : index
    %c0_18 = arith.constant 0 : index
    %19 = vector.load %arg8[%c0_17, %c0_18] : memref<1x64xf32, #tpu.memory_space<vmem>>, vector<1x64xf32>
    "tpu.trace_start"() <{level = 10 : i32, message = "oh,bh->ob"}> : () -> ()
    %cst_19 = arith.constant dense<0.000000e+00> : vector<1x128xf32>
    %20 = tpu.matmul %19, %18, %cst_19 {dimension_numbers = #tpu.dot_dimension_numbers<[1], [1], [0], [0], [0, 0, 1, 0], [], []>} : vector<1x64xf32>, vector<128x64xf32>, vector<1x128xf32> -> vector<1x128xf32>
    "tpu.trace_stop"() : () -> ()
    %c0_20 = arith.constant 0 : index
    %c0_21 = arith.constant 0 : index
    %21 = vector.load %arg9[%c0_20, %c0_21] : memref<1x1xf32, #tpu.memory_space<vmem>>, vector<1x1xf32>
    %22 = vector.broadcast %21 : vector<1x1xf32> to vector<1x128xf32>
    %23 = arith.addf %20, %22 : vector<1x128xf32>
    %c0_22 = arith.constant 0 : index
    %c0_23 = arith.constant 0 : index
    %24 = vector.load %arg10[%c0_22, %c0_23] : memref<1x128xf32, #tpu.memory_space<vmem>>, vector<1x128xf32>
    tpu.vector_store %arg10[%c0_22, %c0_23], %23 {strides = array<i32>} : memref<1x128xf32, #tpu.memory_space<vmem>>, vector<1x128xf32>,
    return
  }
  func.func @transform_0(%arg0: i32) -> (i32, i32) {
    %c0_i32 = arith.constant 0 : i32
    %c0_i32_0 = arith.constant 0 : i32
    return %arg0, %c0_i32 : i32, i32
  }
  func.func @transform_1(%arg0: i32) -> (i32, i32) {
    %c0_i32 = arith.constant 0 : i32
    %c0_i32_0 = arith.constant 0 : i32
    return %arg0, %c0_i32 : i32, i32
  }
  func.func @transform_2(%arg0: i32) -> (i32, i32) {
    %c0_i32 = arith.constant 0 : i32
    %c0_i32_0 = arith.constant 0 : i32
    %c0_i32_1 = arith.constant 0 : i32
    return %c0_i32, %c0_i32_0 : i32, i32
  }
  func.func @transform_3(%arg0: i32) -> (i32, i32) {
    %c0_i32 = arith.constant 0 : i32
    %c0_i32_0 = arith.constant 0 : i32
    %c0_i32_1 = arith.constant 0 : i32
    return %c0_i32, %c0_i32_0 : i32, i32
  }
  func.func @transform_4(%arg0: i32) -> (i32, i32) {
    %c0_i32 = arith.constant 0 : i32
    %c0_i32_0 = arith.constant 0 : i32
    %c0_i32_1 = arith.constant 0 : i32
    return %c0_i32, %c0_i32_0 : i32, i32
  }
  func.func @transform_5(%arg0: i32) -> (i32, i32) {
    %c0_i32 = arith.constant 0 : i32
    %c0_i32_0 = arith.constant 0 : i32
    %c0_i32_1 = arith.constant 0 : i32
    return %c0_i32, %c0_i32_0 : i32, i32
  }
  func.func @transform_6(%arg0: i32) -> (i32, i32) {
    %c0_i32 = arith.constant 0 : i32
    %c0_i32_0 = arith.constant 0 : i32
    %c0_i32_1 = arith.constant 0 : i32
    return %c0_i32, %c0_i32_0 : i32, i32
  }
  func.func @transform_7(%arg0: i32) -> (i32, i32) {
    %c0_i32 = arith.constant 0 : i32
    %c0_i32_0 = arith.constant 0 : i32
    %c0_i32_1 = arith.constant 0 : i32
    return %c0_i32, %c0_i32_0 : i32, i32
  }
  func.func @transform_8(%arg0: i32) -> (i32, i32) {
    %c0_i32 = arith.constant 0 : i32
    %c0_i32_0 = arith.constant 0 : i32
    %c0_i32_1 = arith.constant 0 : i32
    return %c0_i32, %c0_i32_0 : i32, i32
  }
  func.func @transform_9(%arg0: i32) -> (i32, i32) {
    %c0_i32 = arith.constant 0 : i32
    %c0_i32_0 = arith.constant 0 : i32
    return %c0_i32, %arg0 : i32, i32
  }
}

</mosaic_0001>

<llo_original>
// kernel: tpu_custom_call.1
$region0: #{tpu_custom_call.1}
  #allocation0 [shape = 'u32[]', space=smem, size = 0x4, offset = 0x4, fixed_abs, tag = 'smem constant byte address 0x4 - core index']
  #allocation1 [shape = 'u32[144,128]{1,0:T(1,128)}', space=vmem, size = 0x12000, scoped, tag = 'internal scratch']
  #allocation2 [shape = 'f32[1,1]{1,0:T(1,128)S(1)}', space=vmem, size = 0x200, scoped, tag = 'scoped memory for tpu_custom_call.1']
  %s0 = inlined_call_operand.vmem [shape: bf16[2,641], index: 0, kind: input, shape index: {}]
  %s1 = inlined_call_operand.vmem [shape: f32[2,18], index: 1, kind: input, shape index: {}]
  %s2 = inlined_call_operand.vmem [shape: bf16[641,16], index: 2, kind: input, shape index: {}]
  %s3 = inlined_call_operand.vmem [shape: f32[1,16], index: 3, kind: input, shape index: {}]
  %s4 = inlined_call_operand.vmem [shape: f32[16,64], index: 4, kind: input, shape index: {}]
  %s5 = inlined_call_operand.vmem [shape: f32[18,64], index: 5, kind: input, shape index: {}]
  %s6 = inlined_call_operand.vmem [shape: f32[1,64], index: 6, kind: input, shape index: {}]
  %s7 = inlined_call_operand.vmem [shape: f32[1,64], index: 7, kind: input, shape index: {}]
  %s8 = inlined_call_operand.<no memory space> [shape: f32[1,1], index: 8, kind: input, shape index: {}]
  %s9 = inlined_call_operand.hbm [shape: f32[1,128], index: 9, kind: output, shape index: {}]
  %s10 = sld [smem:[#allocation0]]
  $region46: #{tpu_custom_call.1} parent=0
    _
  %s12 = ssub.s32 1, %s10
  %s13 = scalar_select 0, %s12, %s10
  %v14 = vstv %s8
  %15 = vst [vmem:[#allocation2] sm:$0x1] %v14
  $region1: #{tpu_custom_call.1} parent=0
    #allocation3 [shape = 'u8[512]{0}', space=vmem, size = 0x400, scoped, tag = 'output window, operand 0, single buffered']
    #allocation4 [shape = 's32[1]{0}', space=sflag, size = 0x4, scoped, tag = 'scoped memory for tpu_custom_call.1']
    %16 = vsyncpa [#allocation4], 0
    // Predicated region
    $region2: #{tpu_custom_call.1} parent=1 // pred_check
      _
    $region3: #{tpu_custom_call.1} parent=1 // pred_check_branch
      %18 = sbr.rel (0) target = $region5
    $region4: #{tpu_custom_call.1} parent=1 // pred_region
      _
    $region5: #{tpu_custom_call.1} parent=1 // pred_fallthru
      _
    // Predicated region
    $region6: #{tpu_custom_call.1} parent=1 // pred_check
      _
    $region7: #{tpu_custom_call.1} parent=1 // pred_check_branch
      %20 = sbr.rel (0) target = $region9
    $region8: #{tpu_custom_call.1} parent=1 // pred_region
      _
    $region9: #{tpu_custom_call.1} parent=1 // pred_fallthru
      _
    // Predicated region
    $region10: #{tpu_custom_call.1} parent=1 // pred_check
      _
    $region11: #{tpu_custom_call.1} parent=1 // pred_check_branch
      %22 = sbr.rel (0) target = $region13
    $region12: #{tpu_custom_call.1} parent=1 // pred_region
      _
    $region13: #{tpu_custom_call.1} parent=1 // pred_fallthru
      _
    // Predicated region
    $region14: #{tpu_custom_call.1} parent=1 // pred_check
      _
    $region15: #{tpu_custom_call.1} parent=1 // pred_check_branch
      %24 = sbr.rel (0) target = $region17
    $region16: #{tpu_custom_call.1} parent=1 // pred_region
      _
    $region17: #{tpu_custom_call.1} parent=1 // pred_fallthru
      _
    // Predicated region
    $region18: #{tpu_custom_call.1} parent=1 // pred_check
      _
    $region19: #{tpu_custom_call.1} parent=1 // pred_check_branch
      %26 = sbr.rel (0) target = $region21
    $region20: #{tpu_custom_call.1} parent=1 // pred_region
      _
    $region21: #{tpu_custom_call.1} parent=1 // pred_fallthru
      _
    // Predicated region
    $region22: #{tpu_custom_call.1} parent=1 // pred_check
      _
    $region23: #{tpu_custom_call.1} parent=1 // pred_check_branch
      %28 = sbr.rel (0) target = $region25
    $region24: #{tpu_custom_call.1} parent=1 // pred_region
      _
    $region25: #{tpu_custom_call.1} parent=1 // pred_fallthru
      _
    // Predicated region
    $region26: #{tpu_custom_call.1} parent=1 // pred_check
      _
    $region27: #{tpu_custom_call.1} parent=1 // pred_check_branch
      %30 = sbr.rel (0) target = $region29
    $region28: #{tpu_custom_call.1} parent=1 // pred_region
      _
    $region29: #{tpu_custom_call.1} parent=1 // pred_fallthru
      _
    // Predicated region
    $region30: #{tpu_custom_call.1} parent=1 // pred_check
      _
    $region31: #{tpu_custom_call.1} parent=1 // pred_check_branch
      %32 = sbr.rel (0) target = $region33
    $region32: #{tpu_custom_call.1} parent=1 // pred_region
      _
    $region33: #{tpu_custom_call.1} parent=1 // pred_fallthru
      _
    // Predicated region
    $region34: #{tpu_custom_call.1} parent=1 // pred_check
      _
    $region35: #{tpu_custom_call.1} parent=1 // pred_check_branch
      %34 = sbr.rel (0) target = $region37
    $region36: #{tpu_custom_call.1} parent=1 // pred_region
      _
    $region37: #{tpu_custom_call.1} parent=1 // pred_fallthru
      _
    %v36 = vld [vmem:[%s0] sm:$0x3f]
    %v37 = vld [vmem:[%s0 + $0x6] sm:$0x3f]
    %v38 = vld [vmem:[%s0 + $0xc] sm:$0x3f]
    %v39 = vld [vmem:[%s0 + $0x12] sm:$0x3f]
    %v40 = vld [vmem:[%s0 + $0x18] sm:$0x3f]
    %v41 = vld [vmem:[%s0 + $0x1e] sm:$0x3f]
    %v42 = vld [vmem:[%s0 + $0x24] sm:$0x3f]
    %v43 = vld [vmem:[%s0 + $0x2a] sm:$0x3f]
    %v44 = vld [vmem:[%s0 + $0x30] sm:$0x3f]
    %v45 = vld [vmem:[%s0 + $0x36] sm:$0x3f]
    %v46 = vld [vmem:[%s0 + $0x3c] sm:$0x3f]
    %v47 = vld [vmem:[%s0 + $0x42] sm:$0x3f]
    %v48 = vld [vmem:[%s0 + $0x48] sm:$0x3f]
    %v49 = vld [vmem:[%s0 + $0x4e] sm:$0x3f]
    %v50 = vld [vmem:[%s0 + $0x54] sm:$0x3f]
    %v51 = vld [vmem:[%s0 + $0x5a] sm:$0x3f]
    %v52 = vld [vmem:[%s0 + $0x60] sm:$0x3f]
    %v53 = vld [vmem:[%s0 + $0x66] sm:$0x3f]
    %v54 = vld [vmem:[%s0 + $0x6c] sm:$0x3f]
    %v55 = vld [vmem:[%s0 + $0x72] sm:$0x3f]
    %v56 = vld [vmem:[%s0 + $0x78] sm:$0x3f]
    %v57 = vld [vmem:[%s0 + $0x7e] sm:$0x3f]
    %v58 = vld [vmem:[%s0 + $0x84] sm:$0x3f]
    %v59 = vld [vmem:[%s0 + $0x8a] sm:$0x3f]
    %v60 = vld [vmem:[%s0 + $0x90] sm:$0x3f]
    %v61 = vld [vmem:[%s0 + $0x96] sm:$0x3f]
    %v62 = vld [vmem:[%s0 + $0x9c] sm:$0x3f]
    %v63 = vld [vmem:[%s0 + $0xa2] sm:$0x3f]
    %v64 = vld [vmem:[%s0 + $0xa8] sm:$0x3f]
    %v65 = vld [vmem:[%s0 + $0xae] sm:$0x3f]
    %v66 = vld [vmem:[%s0 + $0xb4] sm:$0x3f]
    %v67 = vld [vmem:[%s0 + $0xba] sm:$0x3f]
    %v68 = vld [vmem:[%s0 + $0xc0] sm:$0x3f]
    %v69 = vld [vmem:[%s0 + $0xc6] sm:$0x3f]
    %v70 = vld [vmem:[%s0 + $0xcc] sm:$0x3f]
    %v71 = vld [vmem:[%s0 + $0xd2] sm:$0x3f]
    %v72 = vld [vmem:[%s0 + $0xd8] sm:$0x3f]
    %v73 = vld [vmem:[%s0 + $0xde] sm:$0x3f]
    %v74 = vld [vmem:[%s0 + $0xe4] sm:$0x3f]
    %v75 = vld [vmem:[%s0 + $0xea] sm:$0x3f]
    %v76 = vld [vmem:[%s0 + $0xf0] sm:$0x3f]
    %v77 = vld [vmem:[%s0 + $0xf6] sm:$0x3f]
    %v78 = vld [vmem:[%s0 + $0xfc] sm:$0x3f]
    %v79 = vld [vmem:[%s0 + $0x102] sm:$0x3f]
    %v80 = vld [vmem:[%s0 + $0x108] sm:$0x3f]
    %v81 = vld [vmem:[%s0 + $0x10e] sm:$0x3f]
    %v82 = vld [vmem:[%s0 + $0x114] sm:$0x3f]
    %v83 = vld [vmem:[%s0 + $0x11a] sm:$0x3f]
    %v84 = vld [vmem:[%s0 + $0x120] sm:$0x3f]
    %v85 = vld [vmem:[%s0 + $0x126] sm:$0x3f]
    %v86 = vld [vmem:[%s0 + $0x12c] sm:$0x3f]
    %v87 = vld [vmem:[%s0 + $0x132] sm:$0x3f]
    %v88 = vld [vmem:[%s0 + $0x138] sm:$0x3f]
    %v89 = vld [vmem:[%s0 + $0x13e] sm:$0x3f]
    %v90 = vld [vmem:[%s0 + $0x144] sm:$0x3f]
    %v91 = vld [vmem:[%s0 + $0x14a] sm:$0x3f]
    %v92 = vld [vmem:[%s0 + $0x150] sm:$0x3f]
    %v93 = vld [vmem:[%s0 + $0x156] sm:$0x3f]
    %v94 = vld [vmem:[%s0 + $0x15c] sm:$0x3f]
    %v95 = vld [vmem:[%s0 + $0x162] sm:$0x3f]
    %v96 = vld [vmem:[%s0 + $0x168] sm:$0x3f]
    %v97 = vld [vmem:[%s0 + $0x16e] sm:$0x3f]
    %v98 = vld [vmem:[%s0 + $0x174] sm:$0x3f]
    %v99 = vld [vmem:[%s0 + $0x17a] sm:$0x3f]
    %v100 = vld [vmem:[%s2] sm:$0xf]
    %v101 = vld [vmem:[%s2 + $0x4] sm:$0xf]
    %v102 = vld [vmem:[%s2 + $0x8] sm:$0xf]
    %v103 = vld [vmem:[%s2 + $0xc] sm:$0xf]
    %v104 = vld [vmem:[%s2 + $0x10] sm:$0xf]
    %v105 = vld [vmem:[%s2 + $0x14] sm:$0xf]
    %v106 = vld [vmem:[%s2 + $0x18] sm:$0xf]
    %v107 = vld [vmem:[%s2 + $0x1c] sm:$0xf]
    %v108 = vld [vmem:[%s2 + $0x20] sm:$0xf]
    %v109 = vld [vmem:[%s2 + $0x24] sm:$0xf]
    %v110 = vld [vmem:[%s2 + $0x28] sm:$0xf]
    %v111 = vld [vmem:[%s2 + $0x2c] sm:$0xf]
    %v112 = vld [vmem:[%s2 + $0x30] sm:$0xf]
    %v113 = vld [vmem:[%s2 + $0x34] sm:$0xf]
    %v114 = vld [vmem:[%s2 + $0x38] sm:$0xf]
    %v115 = vld [vmem:[%s2 + $0x3c] sm:$0xf]
    %v116 = vld [vmem:[%s2 + $0x40] sm:$0xf]
    %v117 = vld [vmem:[%s2 + $0x44] sm:$0xf]
    %v118 = vld [vmem:[%s2 + $0x48] sm:$0xf]
    %v119 = vld [vmem:[%s2 + $0x4c] sm:$0xf]
    %v120 = vld [vmem:[%s2 + $0x50] sm:$0xf]
    %v121 = vld [vmem:[%s2 + $0x54] sm:$0xf]
    %v122 = vld [vmem:[%s2 + $0x58] sm:$0xf]
    %v123 = vld [vmem:[%s2 + $0x5c] sm:$0xf]
    %v124 = vld [vmem:[%s2 + $0x60] sm:$0xf]
    %v125 = vld [vmem:[%s2 + $0x64] sm:$0xf]
    %v126 = vld [vmem:[%s2 + $0x68] sm:$0xf]
    %v127 = vld [vmem:[%s2 + $0x6c] sm:$0xf]
    %v128 = vld [vmem:[%s2 + $0x70] sm:$0xf]
    %v129 = vld [vmem:[%s2 + $0x74] sm:$0xf]
    %v130 = vld [vmem:[%s2 + $0x78] sm:$0xf]
    %v131 = vld [vmem:[%s2 + $0x7c] sm:$0xf]
    %v132 = vld [vmem:[%s2 + $0x80] sm:$0xf]
    %v133 = vld [vmem:[%s2 + $0x84] sm:$0xf]
    %v134 = vld [vmem:[%s2 + $0x88] sm:$0xf]
    %v135 = vld [vmem:[%s2 + $0x8c] sm:$0xf]
    %v136 = vld [vmem:[%s2 + $0x90] sm:$0xf]
    %v137 = vld [vmem:[%s2 + $0x94] sm:$0xf]
    %v138 = vld [vmem:[%s2 + $0x98] sm:$0xf]
    %v139 = vld [vmem:[%s2 + $0x9c] sm:$0xf]
    %v140 = vld [vmem:[%s2 + $0xa0] sm:$0xf]
    %v141 = vld [vmem:[%s2 + $0xa4] sm:$0xf]
    %v142 = vld [vmem:[%s2 + $0xa8] sm:$0xf]
    %v143 = vld [vmem:[%s2 + $0xac] sm:$0xf]
    %v144 = vld [vmem:[%s2 + $0xb0] sm:$0xf]
    %v145 = vld [vmem:[%s2 + $0xb4] sm:$0xf]
    %v146 = vld [vmem:[%s2 + $0xb8] sm:$0xf]
    %v147 = vld [vmem:[%s2 + $0xbc] sm:$0xf]
    %v148 = vld [vmem:[%s2 + $0xc0] sm:$0xf]
    %v149 = vld [vmem:[%s2 + $0xc4] sm:$0xf]
    %v150 = vld [vmem:[%s2 + $0xc8] sm:$0xf]
    %v151 = vld [vmem:[%s2 + $0xcc] sm:$0xf]
    %v152 = vld [vmem:[%s2 + $0xd0] sm:$0xf]
    %v153 = vld [vmem:[%s2 + $0xd4] sm:$0xf]
    %v154 = vld [vmem:[%s2 + $0xd8] sm:$0xf]
    %v155 = vld [vmem:[%s2 + $0xdc] sm:$0xf]
    %v156 = vld [vmem:[%s2 + $0xe0] sm:$0xf]
    %v157 = vld [vmem:[%s2 + $0xe4] sm:$0xf]
    %v158 = vld [vmem:[%s2 + $0xe8] sm:$0xf]
    %v159 = vld [vmem:[%s2 + $0xec] sm:$0xf]
    %v160 = vld [vmem:[%s2 + $0xf0] sm:$0xf]
    %v161 = vld [vmem:[%s2 + $0xf4] sm:$0xf]
    %v162 = vld [vmem:[%s2 + $0xf8] sm:$0xf]
    %v163 = vld [vmem:[%s2 + $0xfc] sm:$0xf]
    %v164 = vld [vmem:[%s2 + $0x100] sm:$0xf]
    %v165 = vld [vmem:[%s2 + $0x104] sm:$0xf]
    %v166 = vld [vmem:[%s2 + $0x108] sm:$0xf]
    %v167 = vld [vmem:[%s2 + $0x10c] sm:$0xf]
    %v168 = vld [vmem:[%s2 + $0x110] sm:$0xf]
    %v169 = vld [vmem:[%s2 + $0x114] sm:$0xf]
    %v170 = vld [vmem:[%s2 + $0x118] sm:$0xf]
    %v171 = vld [vmem:[%s2 + $0x11c] sm:$0xf]
    %v172 = vld [vmem:[%s2 + $0x120] sm:$0xf]
    %v173 = vld [vmem:[%s2 + $0x124] sm:$0xf]
    %v174 = vld [vmem:[%s2 + $0x128] sm:$0xf]
    %v175 = vld [vmem:[%s2 + $0x12c] sm:$0xf]
    %v176 = vld [vmem:[%s2 + $0x130] sm:$0xf]
    %v177 = vld [vmem:[%s2 + $0x134] sm:$0xf]
    %v178 = vld [vmem:[%s2 + $0x138] sm:$0xf]
    %v179 = vld [vmem:[%s2 + $0x13c] sm:$0xf]
    %v180 = vld [vmem:[%s2 + $0x140] sm:$0x1]
    %v181 = vld [vmem:[%s3] sm:$0x1]
    %v183 = vlaneseq
    %v184 = vshrl.u32 %v183, 7
    %v185 = vsub.s32 0, %v184
    %v186 = vrot.slane %v181, %v185
    %v252 = vcombine.low %v36, %v37
    %v253 = vcombine.high %v36, %v37
    %v254 = vcombine.low %v38, %v39
    %v255 = vcombine.high %v38, %v39
    %v256 = vcombine.low %v40, %v41
    %v257 = vcombine.high %v40, %v41
    %v258 = vcombine.low %v42, %v43
    %v259 = vcombine.high %v42, %v43
    %v261 = vunpack.c.l.s4 1966171168
    %v262 = vunpack.c.0.s8 %v261
    %v263 = vlaneseq
    %v264 = vshrl.u32 %v263, 7
    %v265 = vsub.s32 %v262, %v264
    %v266 = vrot.slane %v252, %v265
    %v268 = vunpack.c.l.s4 1966171168
    %v269 = vunpack.c.0.s8 %v268
    %v270 = vlaneseq
    %v271 = vshrl.u32 %v270, 7
    %v272 = vsub.s32 %v269, %v271
    %v273 = vrot.slane %v253, %v272
    %v275 = vunpack.c.l.s4 1966171168
    %v276 = vunpack.c.0.s8 %v275
    %v277 = vlaneseq
    %v278 = vshrl.u32 %v277, 7
    %v279 = vsub.s32 %v276, %v278
    %v280 = vrot.slane %v254, %v279
    %v282 = vunpack.c.l.s4 1966171168
    %v283 = vunpack.c.0.s8 %v282
    %v284 = vlaneseq
    %v285 = vshrl.u32 %v284, 7
    %v286 = vsub.s32 %v283, %v285
    %v287 = vrot.slane %v255, %v286
    %v289 = vunpack.c.l.s4 1966171168
    %v290 = vunpack.c.0.s8 %v289
    %v291 = vlaneseq
    %v292 = vshrl.u32 %v291, 7
    %v293 = vsub.s32 %v290, %v292
    %v294 = vrot.slane %v256, %v293
    %v296 = vunpack.c.l.s4 1966171168
    %v297 = vunpack.c.0.s8 %v296
    %v298 = vlaneseq
    %v299 = vshrl.u32 %v298, 7
    %v300 = vsub.s32 %v297, %v299
    %v301 = vrot.slane %v257, %v300
    %v303 = vunpack.c.l.s4 1966171168
    %v304 = vunpack.c.0.s8 %v303
    %v305 = vlaneseq
    %v306 = vshrl.u32 %v305, 7
    %v307 = vsub.s32 %v304, %v306
    %v308 = vrot.slane %v258, %v307
    %v310 = vunpack.c.l.s4 1966171168
    %v311 = vunpack.c.0.s8 %v310
    %v312 = vlaneseq
    %v313 = vshrl.u32 %v312, 7
    %v314 = vsub.s32 %v311, %v313
    %v315 = vrot.slane %v259, %v314
    %v316 = vcombine.low %v266, %v280
    %v317 = vcombine.high %v266, %v280
    %v318 = vcombine.low %v273, %v287
    %v319 = vcombine.high %v273, %v287
    %v320 = vcombine.low %v294, %v308
    %v321 = vcombine.high %v294, %v308
    %v322 = vcombine.low %v301, %v315
    %v323 = vcombine.high %v301, %v315
    %v325 = vunpack.c.l.s4 1966171168
    %v326 = vunpack.c.0.s8 %v325
    %v327 = vlaneseq
    %v328 = vshrl.u32 %v327, 7
    %v329 = vsub.s32 %v326, %v328
    %v330 = vrot.slane %v316, %v329
    %v332 = vunpack.c.l.s4 1966171168
    %v333 = vunpack.c.0.s8 %v332
    %v334 = vlaneseq
    %v335 = vshrl.u32 %v334, 7
    %v336 = vsub.s32 %v333, %v335
    %v337 = vrot.slane %v318, %v336
    %v339 = vunpack.c.l.s4 1966171168
    %v340 = vunpack.c.0.s8 %v339
    %v341 = vlaneseq
    %v342 = vshrl.u32 %v341, 7
    %v343 = vsub.s32 %v340, %v342
    %v344 = vrot.slane %v317, %v343
    %v346 = vunpack.c.l.s4 1966171168
    %v347 = vunpack.c.0.s8 %v346
    %v348 = vlaneseq
    %v349 = vshrl.u32 %v348, 7
    %v350 = vsub.s32 %v347, %v349
    %v351 = vrot.slane %v319, %v350
    %v353 = vunpack.c.l.s4 1966171168
    %v354 = vunpack.c.0.s8 %v353
    %v355 = vlaneseq
    %v356 = vshrl.u32 %v355, 7
    %v357 = vsub.s32 %v354, %v356
    %v358 = vrot.slane %v320, %v357
    %v360 = vunpack.c.l.s4 1966171168
    %v361 = vunpack.c.0.s8 %v360
    %v362 = vlaneseq
    %v363 = vshrl.u32 %v362, 7
    %v364 = vsub.s32 %v361, %v363
    %v365 = vrot.slane %v322, %v364
    %v367 = vunpack.c.l.s4 1966171168
    %v368 = vunpack.c.0.s8 %v367
    %v369 = vlaneseq
    %v370 = vshrl.u32 %v369, 7
    %v371 = vsub.s32 %v368, %v370
    %v372 = vrot.slane %v321, %v371
    %v374 = vunpack.c.l.s4 1966171168
    %v375 = vunpack.c.0.s8 %v374
    %v376 = vlaneseq
    %v377 = vshrl.u32 %v376, 7
    %v378 = vsub.s32 %v375, %v377
    %v379 = vrot.slane %v323, %v378
    %v380 = vcombine.low %v330, %v358
    %v381 = vcombine.high %v330, %v358
    %v382 = vcombine.low %v337, %v365
    %v383 = vcombine.low %v344, %v372
    %v384 = vcombine.high %v344, %v372
    %v385 = vcombine.low %v351, %v379
    %v386 = vcombine.low %v44, %v45
    %v387 = vcombine.high %v44, %v45
    %v388 = vcombine.low %v46, %v47
    %v389 = vcombine.high %v46, %v47
    %v390 = vcombine.low %v48, %v49
    %v391 = vcombine.high %v48, %v49
    %v392 = vcombine.low %v50, %v51
    %v393 = vcombine.high %v50, %v51
    %v395 = vunpack.c.l.s4 1966171168
    %v396 = vunpack.c.0.s8 %v395
    %v397 = vlaneseq
    %v398 = vshrl.u32 %v397, 7
    %v399 = vsub.s32 %v396, %v398
    %v400 = vrot.slane %v386, %v399
    %v402 = vunpack.c.l.s4 1966171168
    %v403 = vunpack.c.0.s8 %v402
    %v404 = vlaneseq
    %v405 = vshrl.u32 %v404, 7
    %v406 = vsub.s32 %v403, %v405
    %v407 = vrot.slane %v387, %v406
    %v409 = vunpack.c.l.s4 1966171168
    %v410 = vunpack.c.0.s8 %v409
    %v411 = vlaneseq
    %v412 = vshrl.u32 %v411, 7
    %v413 = vsub.s32 %v410, %v412
    %v414 = vrot.slane %v388, %v413
    %v416 = vunpack.c.l.s4 1966171168
    %v417 = vunpack.c.0.s8 %v416
    %v418 = vlaneseq
    %v419 = vshrl.u32 %v418, 7
    %v420 = vsub.s32 %v417, %v419
    %v421 = vrot.slane %v389, %v420
    %v423 = vunpack.c.l.s4 1966171168
    %v424 = vunpack.c.0.s8 %v423
    %v425 = vlaneseq
    %v426 = vshrl.u32 %v425, 7
    %v427 = vsub.s32 %v424, %v426
    %v428 = vrot.slane %v390, %v427
    %v430 = vunpack.c.l.s4 1966171168
    %v431 = vunpack.c.0.s8 %v430
    %v432 = vlaneseq
    %v433 = vshrl.u32 %v432, 7
    %v434 = vsub.s32 %v431, %v433
    %v435 = vrot.slane %v391, %v434
    %v437 = vunpack.c.l.s4 1966171168
    %v438 = vunpack.c.0.s8 %v437
    %v439 = vlaneseq
    %v440 = vshrl.u32 %v439, 7
    %v441 = vsub.s32 %v438, %v440
    %v442 = vrot.slane %v392, %v441
    %v444 = vunpack.c.l.s4 1966171168
    %v445 = vunpack.c.0.s8 %v444
    %v446 = vlaneseq
    %v447 = vshrl.u32 %v446, 7
    %v448 = vsub.s32 %v445, %v447
    %v449 = vrot.slane %v393, %v448
    %v450 = vcombine.low %v400, %v414
    %v451 = vcombine.high %v400, %v414
    %v452 = vcombine.low %v407, %v421
    %v453 = vcombine.high %v407, %v421
    %v454 = vcombine.low %v428, %v442
    %v455 = vcombine.high %v428, %v442
    %v456 = vcombine.low %v435, %v449
    %v457 = vcombine.high %v435, %v449
    %v459 = vunpack.c.l.s4 1966171168
    %v460 = vunpack.c.0.s8 %v459
    %v461 = vlaneseq
    %v462 = vshrl.u32 %v461, 7
    %v463 = vsub.s32 %v460, %v462
    %v464 = vrot.slane %v450, %v463
    %v466 = vunpack.c.l.s4 1966171168
    %v467 = vunpack.c.0.s8 %v466
    %v468 = vlaneseq
    %v469 = vshrl.u32 %v468, 7
    %v470 = vsub.s32 %v467, %v469
    %v471 = vrot.slane %v452, %v470
    %v473 = vunpack.c.l.s4 1966171168
    %v474 = vunpack.c.0.s8 %v473
    %v475 = vlaneseq
    %v476 = vshrl.u32 %v475, 7
    %v477 = vsub.s32 %v474, %v476
    %v478 = vrot.slane %v451, %v477
    %v480 = vunpack.c.l.s4 1966171168
    %v481 = vunpack.c.0.s8 %v480
    %v482 = vlaneseq
    %v483 = vshrl.u32 %v482, 7
    %v484 = vsub.s32 %v481, %v483
    %v485 = vrot.slane %v453, %v484
    %v487 = vunpack.c.l.s4 1966171168
    %v488 = vunpack.c.0.s8 %v487
    %v489 = vlaneseq
    %v490 = vshrl.u32 %v489, 7
    %v491 = vsub.s32 %v488, %v490
    %v492 = vrot.slane %v454, %v491
    %v494 = vunpack.c.l.s4 1966171168
    %v495 = vunpack.c.0.s8 %v494
    %v496 = vlaneseq
    %v497 = vshrl.u32 %v496, 7
    %v498 = vsub.s32 %v495, %v497
    %v499 = vrot.slane %v456, %v498
    %v501 = vunpack.c.l.s4 1966171168
    %v502 = vunpack.c.0.s8 %v501
    %v503 = vlaneseq
    %v504 = vshrl.u32 %v503, 7
    %v505 = vsub.s32 %v502, %v504
    %v506 = vrot.slane %v455, %v505
    %v508 = vunpack.c.l.s4 1966171168
    %v509 = vunpack.c.0.s8 %v508
    %v510 = vlaneseq
    %v511 = vshrl.u32 %v510, 7
    %v512 = vsub.s32 %v509, %v511
    %v513 = vrot.slane %v457, %v512
    %v514 = vcombine.low %v464, %v492
    %v515 = vcombine.high %v464, %v492
    %v516 = vcombine.low %v471, %v499
    %v517 = vcombine.low %v478, %v506
    %v518 = vcombine.high %v478, %v506
    %v519 = vcombine.low %v485, %v513
    %v520 = vcombine.low %v52, %v53
    %v521 = vcombine.high %v52, %v53
    %v522 = vcombine.low %v54, %v55
    %v523 = vcombine.high %v54, %v55
    %v524 = vcombine.low %v56, %v57
    %v525 = vcombine.high %v56, %v57
    %v526 = vcombine.low %v58, %v59
    %v527 = vcombine.high %v58, %v59
    %v529 = vunpack.c.l.s4 1966171168
    %v530 = vunpack.c.0.s8 %v529
    %v531 = vlaneseq
    %v532 = vshrl.u32 %v531, 7
    %v533 = vsub.s32 %v530, %v532
    %v534 = vrot.slane %v520, %v533
    %v536 = vunpack.c.l.s4 1966171168
    %v537 = vunpack.c.0.s8 %v536
    %v538 = vlaneseq
    %v539 = vshrl.u32 %v538, 7
    %v540 = vsub.s32 %v537, %v539
    %v541 = vrot.slane %v521, %v540
    %v543 = vunpack.c.l.s4 1966171168
    %v544 = vunpack.c.0.s8 %v543
    %v545 = vlaneseq
    %v546 = vshrl.u32 %v545, 7
    %v547 = vsub.s32 %v544, %v546
    %v548 = vrot.slane %v522, %v547
    %v550 = vunpack.c.l.s4 1966171168
    %v551 = vunpack.c.0.s8 %v550
    %v552 = vlaneseq
    %v553 = vshrl.u32 %v552, 7
    %v554 = vsub.s32 %v551, %v553
    %v555 = vrot.slane %v523, %v554
    %v557 = vunpack.c.l.s4 1966171168
    %v558 = vunpack.c.0.s8 %v557
    %v559 = vlaneseq
    %v560 = vshrl.u32 %v559, 7
    %v561 = vsub.s32 %v558, %v560
    %v562 = vrot.slane %v524, %v561
    %v564 = vunpack.c.l.s4 1966171168
    %v565 = vunpack.c.0.s8 %v564
    %v566 = vlaneseq
    %v567 = vshrl.u32 %v566, 7
    %v568 = vsub.s32 %v565, %v567
    %v569 = vrot.slane %v525, %v568
    %v571 = vunpack.c.l.s4 1966171168
    %v572 = vunpack.c.0.s8 %v571
    %v573 = vlaneseq
    %v574 = vshrl.u32 %v573, 7
    %v575 = vsub.s32 %v572, %v574
    %v576 = vrot.slane %v526, %v575
    %v578 = vunpack.c.l.s4 1966171168
    %v579 = vunpack.c.0.s8 %v578
    %v580 = vlaneseq
    %v581 = vshrl.u32 %v580, 7
    %v582 = vsub.s32 %v579, %v581
    %v583 = vrot.slane %v527, %v582
    %v584 = vcombine.low %v534, %v548
    %v585 = vcombine.high %v534, %v548
    %v586 = vcombine.low %v541, %v555
    %v587 = vcombine.high %v541, %v555
    %v588 = vcombine.low %v562, %v576
    %v589 = vcombine.high %v562, %v576
    %v590 = vcombine.low %v569, %v583
    %v591 = vcombine.high %v569, %v583
    %v593 = vunpack.c.l.s4 1966171168
    %v594 = vunpack.c.0.s8 %v593
    %v595 = vlaneseq
    %v596 = vshrl.u32 %v595, 7
    %v597 = vsub.s32 %v594, %v596
    %v598 = vrot.slane %v584, %v597
    %v600 = vunpack.c.l.s4 1966171168
    %v601 = vunpack.c.0.s8 %v600
    %v602 = vlaneseq
    %v603 = vshrl.u32 %v602, 7
    %v604 = vsub.s32 %v601, %v603
    %v605 = vrot.slane %v586, %v604
    %v607 = vunpack.c.l.s4 1966171168
    %v608 = vunpack.c.0.s8 %v607
    %v609 = vlaneseq
    %v610 = vshrl.u32 %v609, 7
    %v611 = vsub.s32 %v608, %v610
    %v612 = vrot.slane %v585, %v611
    %v614 = vunpack.c.l.s4 1966171168
    %v615 = vunpack.c.0.s8 %v614
    %v616 = vlaneseq
    %v617 = vshrl.u32 %v616, 7
    %v618 = vsub.s32 %v615, %v617
    %v619 = vrot.slane %v587, %v618
    %v621 = vunpack.c.l.s4 1966171168
    %v622 = vunpack.c.0.s8 %v621
    %v623 = vlaneseq
    %v624 = vshrl.u32 %v623, 7
    %v625 = vsub.s32 %v622, %v624
    %v626 = vrot.slane %v588, %v625
    %v628 = vunpack.c.l.s4 1966171168
    %v629 = vunpack.c.0.s8 %v628
    %v630 = vlaneseq
    %v631 = vshrl.u32 %v630, 7
    %v632 = vsub.s32 %v629, %v631
    %v633 = vrot.slane %v590, %v632
    %v635 = vunpack.c.l.s4 1966171168
    %v636 = vunpack.c.0.s8 %v635
    %v637 = vlaneseq
    %v638 = vshrl.u32 %v637, 7
    %v639 = vsub.s32 %v636, %v638
    %v640 = vrot.slane %v589, %v639
    %v642 = vunpack.c.l.s4 1966171168
    %v643 = vunpack.c.0.s8 %v642
    %v644 = vlaneseq
    %v645 = vshrl.u32 %v644, 7
    %v646 = vsub.s32 %v643, %v645
    %v647 = vrot.slane %v591, %v646
    %v648 = vcombine.low %v598, %v626
    %v649 = vcombine.high %v598, %v626
    %v650 = vcombine.low %v605, %v633
    %v651 = vcombine.low %v612, %v640
    %v652 = vcombine.high %v612, %v640
    %v653 = vcombine.low %v619, %v647
    %v654 = vcombine.low %v60, %v61
    %v655 = vcombine.high %v60, %v61
    %v656 = vcombine.low %v62, %v63
    %v657 = vcombine.high %v62, %v63
    %v658 = vcombine.low %v64, %v65
    %v659 = vcombine.high %v64, %v65
    %v660 = vcombine.low %v66, %v67
    %v661 = vcombine.high %v66, %v67
    %v663 = vunpack.c.l.s4 1966171168
    %v664 = vunpack.c.0.s8 %v663
    %v665 = vlaneseq
    %v666 = vshrl.u32 %v665, 7
    %v667 = vsub.s32 %v664, %v666
    %v668 = vrot.slane %v654, %v667
    %v670 = vunpack.c.l.s4 1966171168
    %v671 = vunpack.c.0.s8 %v670
    %v672 = vlaneseq
    %v673 = vshrl.u32 %v672, 7
    %v674 = vsub.s32 %v671, %v673
    %v675 = vrot.slane %v655, %v674
    %v677 = vunpack.c.l.s4 1966171168
    %v678 = vunpack.c.0.s8 %v677
    %v679 = vlaneseq
    %v680 = vshrl.u32 %v679, 7
    %v681 = vsub.s32 %v678, %v680
    %v682 = vrot.slane %v656, %v681
    %v684 = vunpack.c.l.s4 1966171168
    %v685 = vunpack.c.0.s8 %v684
    %v686 = vlaneseq
    %v687 = vshrl.u32 %v686, 7
    %v688 = vsub.s32 %v685, %v687
    %v689 = vrot.slane %v657, %v688
    %v691 = vunpack.c.l.s4 1966171168
    %v692 = vunpack.c.0.s8 %v691
    %v693 = vlaneseq
    %v694 = vshrl.u32 %v693, 7
    %v695 = vsub.s32 %v692, %v694
    %v696 = vrot.slane %v658, %v695
    %v698 = vunpack.c.l.s4 1966171168
    %v699 = vunpack.c.0.s8 %v698
    %v700 = vlaneseq
    %v701 = vshrl.u32 %v700, 7
    %v702 = vsub.s32 %v699, %v701
    %v703 = vrot.slane %v659, %v702
    %v705 = vunpack.c.l.s4 1966171168
    %v706 = vunpack.c.0.s8 %v705
    %v707 = vlaneseq
    %v708 = vshrl.u32 %v707, 7
    %v709 = vsub.s32 %v706, %v708
    %v710 = vrot.slane %v660, %v709
    %v712 = vunpack.c.l.s4 1966171168
    %v713 = vunpack.c.0.s8 %v712
    %v714 = vlaneseq
    %v715 = vshrl.u32 %v714, 7
    %v716 = vsub.s32 %v713, %v715
    %v717 = vrot.slane %v661, %v716
    %v718 = vcombine.low %v668, %v682
    %v719 = vcombine.high %v668, %v682
    %v720 = vcombine.low %v675, %v689
    %v721 = vcombine.high %v675, %v689
    %v722 = vcombine.low %v696, %v710
    %v723 = vcombine.high %v696, %v710
    %v724 = vcombine.low %v703, %v717
    %v725 = vcombine.high %v703, %v717
    %v727 = vunpack.c.l.s4 1966171168
    %v728 = vunpack.c.0.s8 %v727
    %v729 = vlaneseq
    %v730 = vshrl.u32 %v729, 7
    %v731 = vsub.s32 %v728, %v730
    %v732 = vrot.slane %v718, %v731
    %v734 = vunpack.c.l.s4 1966171168
    %v735 = vunpack.c.0.s8 %v734
    %v736 = vlaneseq
    %v737 = vshrl.u32 %v736, 7
    %v738 = vsub.s32 %v735, %v737
    %v739 = vrot.slane %v720, %v738
    %v741 = vunpack.c.l.s4 1966171168
    %v742 = vunpack.c.0.s8 %v741
    %v743 = vlaneseq
    %v744 = vshrl.u32 %v743, 7
    %v745 = vsub.s32 %v742, %v744
    %v746 = vrot.slane %v719, %v745
    %v748 = vunpack.c.l.s4 1966171168
    %v749 = vunpack.c.0.s8 %v748
    %v750 = vlaneseq
    %v751 = vshrl.u32 %v750, 7
    %v752 = vsub.s32 %v749, %v751
    %v753 = vrot.slane %v721, %v752
    %v755 = vunpack.c.l.s4 1966171168
    %v756 = vunpack.c.0.s8 %v755
    %v757 = vlaneseq
    %v758 = vshrl.u32 %v757, 7
    %v759 = vsub.s32 %v756, %v758
    %v760 = vrot.slane %v722, %v759
    %v762 = vunpack.c.l.s4 1966171168
    %v763 = vunpack.c.0.s8 %v762
    %v764 = vlaneseq
    %v765 = vshrl.u32 %v764, 7
    %v766 = vsub.s32 %v763, %v765
    %v767 = vrot.slane %v724, %v766
    %v769 = vunpack.c.l.s4 1966171168
    %v770 = vunpack.c.0.s8 %v769
    %v771 = vlaneseq
    %v772 = vshrl.u32 %v771, 7
    %v773 = vsub.s32 %v770, %v772
    %v774 = vrot.slane %v723, %v773
    %v776 = vunpack.c.l.s4 1966171168
    %v777 = vunpack.c.0.s8 %v776
    %v778 = vlaneseq
    %v779 = vshrl.u32 %v778, 7
    %v780 = vsub.s32 %v777, %v779
    %v781 = vrot.slane %v725, %v780
    %v782 = vcombine.low %v732, %v760
    %v783 = vcombine.high %v732, %v760
    %v784 = vcombine.low %v739, %v767
    %v785 = vcombine.low %v746, %v774
    %v786 = vcombine.high %v746, %v774
    %v787 = vcombine.low %v753, %v781
    %v788 = vcombine.low %v68, %v69
    %v789 = vcombine.high %v68, %v69
    %v790 = vcombine.low %v70, %v71
    %v791 = vcombine.high %v70, %v71
    %v792 = vcombine.low %v72, %v73
    %v793 = vcombine.high %v72, %v73
    %v794 = vcombine.low %v74, %v75
    %v795 = vcombine.high %v74, %v75
    %v797 = vunpack.c.l.s4 1966171168
    %v798 = vunpack.c.0.s8 %v797
    %v799 = vlaneseq
    %v800 = vshrl.u32 %v799, 7
    %v801 = vsub.s32 %v798, %v800
    %v802 = vrot.slane %v788, %v801
    %v804 = vunpack.c.l.s4 1966171168
    %v805 = vunpack.c.0.s8 %v804
    %v806 = vlaneseq
    %v807 = vshrl.u32 %v806, 7
    %v808 = vsub.s32 %v805, %v807
    %v809 = vrot.slane %v789, %v808
    %v811 = vunpack.c.l.s4 1966171168
    %v812 = vunpack.c.0.s8 %v811
    %v813 = vlaneseq
    %v814 = vshrl.u32 %v813, 7
    %v815 = vsub.s32 %v812, %v814
    %v816 = vrot.slane %v790, %v815
    %v818 = vunpack.c.l.s4 1966171168
    %v819 = vunpack.c.0.s8 %v818
    %v820 = vlaneseq
    %v821 = vshrl.u32 %v820, 7
    %v822 = vsub.s32 %v819, %v821
    %v823 = vrot.slane %v791, %v822
    %v825 = vunpack.c.l.s4 1966171168
    %v826 = vunpack.c.0.s8 %v825
    %v827 = vlaneseq
    %v828 = vshrl.u32 %v827, 7
    %v829 = vsub.s32 %v826, %v828
    %v830 = vrot.slane %v792, %v829
    %v832 = vunpack.c.l.s4 1966171168
    %v833 = vunpack.c.0.s8 %v832
    %v834 = vlaneseq
    %v835 = vshrl.u32 %v834, 7
    %v836 = vsub.s32 %v833, %v835
    %v837 = vrot.slane %v793, %v836
    %v839 = vunpack.c.l.s4 1966171168
    %v840 = vunpack.c.0.s8 %v839
    %v841 = vlaneseq
    %v842 = vshrl.u32 %v841, 7
    %v843 = vsub.s32 %v840, %v842
    %v844 = vrot.slane %v794, %v843
    %v846 = vunpack.c.l.s4 1966171168
    %v847 = vunpack.c.0.s8 %v846
    %v848 = vlaneseq
    %v849 = vshrl.u32 %v848, 7
    %v850 = vsub.s32 %v847, %v849
    %v851 = vrot.slane %v795, %v850
    %v852 = vcombine.low %v802, %v816
    %v853 = vcombine.high %v802, %v816
    %v854 = vcombine.low %v809, %v823
    %v855 = vcombine.high %v809, %v823
    %v856 = vcombine.low %v830, %v844
    %v857 = vcombine.high %v830, %v844
    %v858 = vcombine.low %v837, %v851
    %v859 = vcombine.high %v837, %v851
    %v861 = vunpack.c.l.s4 1966171168
    %v862 = vunpack.c.0.s8 %v861
    %v863 = vlaneseq
    %v864 = vshrl.u32 %v863, 7
    %v865 = vsub.s32 %v862, %v864
    %v866 = vrot.slane %v852, %v865
    %v868 = vunpack.c.l.s4 1966171168
    %v869 = vunpack.c.0.s8 %v868
    %v870 = vlaneseq
    %v871 = vshrl.u32 %v870, 7
    %v872 = vsub.s32 %v869, %v871
    %v873 = vrot.slane %v854, %v872
    %v875 = vunpack.c.l.s4 1966171168
    %v876 = vunpack.c.0.s8 %v875
    %v877 = vlaneseq
    %v878 = vshrl.u32 %v877, 7
    %v879 = vsub.s32 %v876, %v878
    %v880 = vrot.slane %v853, %v879
    %v882 = vunpack.c.l.s4 1966171168
    %v883 = vunpack.c.0.s8 %v882
    %v884 = vlaneseq
    %v885 = vshrl.u32 %v884, 7
    %v886 = vsub.s32 %v883, %v885
    %v887 = vrot.slane %v855, %v886
    %v889 = vunpack.c.l.s4 1966171168
    %v890 = vunpack.c.0.s8 %v889
    %v891 = vlaneseq
    %v892 = vshrl.u32 %v891, 7
    %v893 = vsub.s32 %v890, %v892
    %v894 = vrot.slane %v856, %v893
    %v896 = vunpack.c.l.s4 1966171168
    %v897 = vunpack.c.0.s8 %v896
    %v898 = vlaneseq
    %v899 = vshrl.u32 %v898, 7
    %v900 = vsub.s32 %v897, %v899
    %v901 = vrot.slane %v858, %v900
    %v903 = vunpack.c.l.s4 1966171168
    %v904 = vunpack.c.0.s8 %v903
    %v905 = vlaneseq
    %v906 = vshrl.u32 %v905, 7
    %v907 = vsub.s32 %v904, %v906
    %v908 = vrot.slane %v857, %v907
    %v910 = vunpack.c.l.s4 1966171168
    %v911 = vunpack.c.0.s8 %v910
    %v912 = vlaneseq
    %v913 = vshrl.u32 %v912, 7
    %v914 = vsub.s32 %v911, %v913
    %v915 = vrot.slane %v859, %v914
    %v916 = vcombine.low %v866, %v894
    %v917 = vcombine.high %v866, %v894
    %v918 = vcombine.low %v873, %v901
    %v919 = vcombine.low %v880, %v908
    %v920 = vcombine.high %v880, %v908
    %v921 = vcombine.low %v887, %v915
    %v922 = vcombine.low %v76, %v77
    %v923 = vcombine.high %v76, %v77
    %v924 = vcombine.low %v78, %v79
    %v925 = vcombine.high %v78, %v79
    %v926 = vcombine.low %v80, %v81
    %v927 = vcombine.high %v80, %v81
    %v928 = vcombine.low %v82, %v83
    %v929 = vcombine.high %v82, %v83
    %v931 = vunpack.c.l.s4 1966171168
    %v932 = vunpack.c.0.s8 %v931
    %v933 = vlaneseq
    %v934 = vshrl.u32 %v933, 7
    %v935 = vsub.s32 %v932, %v934
    %v936 = vrot.slane %v922, %v935
    %v938 = vunpack.c.l.s4 1966171168
    %v939 = vunpack.c.0.s8 %v938
    %v940 = vlaneseq
    %v941 = vshrl.u32 %v940, 7
    %v942 = vsub.s32 %v939, %v941
    %v943 = vrot.slane %v923, %v942
    %v945 = vunpack.c.l.s4 1966171168
    %v946 = vunpack.c.0.s8 %v945
    %v947 = vlaneseq
    %v948 = vshrl.u32 %v947, 7
    %v949 = vsub.s32 %v946, %v948
    %v950 = vrot.slane %v924, %v949
    %v952 = vunpack.c.l.s4 1966171168
    %v953 = vunpack.c.0.s8 %v952
    %v954 = vlaneseq
    %v955 = vshrl.u32 %v954, 7
    %v956 = vsub.s32 %v953, %v955
    %v957 = vrot.slane %v925, %v956
    %v959 = vunpack.c.l.s4 1966171168
    %v960 = vunpack.c.0.s8 %v959
    %v961 = vlaneseq
    %v962 = vshrl.u32 %v961, 7
    %v963 = vsub.s32 %v960, %v962
    %v964 = vrot.slane %v926, %v963
    %v966 = vunpack.c.l.s4 1966171168
    %v967 = vunpack.c.0.s8 %v966
    %v968 = vlaneseq
    %v969 = vshrl.u32 %v968, 7
    %v970 = vsub.s32 %v967, %v969
    %v971 = vrot.slane %v927, %v970
    %v973 = vunpack.c.l.s4 1966171168
    %v974 = vunpack.c.0.s8 %v973
    %v975 = vlaneseq
    %v976 = vshrl.u32 %v975, 7
    %v977 = vsub.s32 %v974, %v976
    %v978 = vrot.slane %v928, %v977
    %v980 = vunpack.c.l.s4 1966171168
    %v981 = vunpack.c.0.s8 %v980
    %v982 = vlaneseq
    %v983 = vshrl.u32 %v982, 7
    %v984 = vsub.s32 %v981, %v983
    %v985 = vrot.slane %v929, %v984
    %v986 = vcombine.low %v936, %v950
    %v987 = vcombine.high %v936, %v950
    %v988 = vcombine.low %v943, %v957
    %v989 = vcombine.high %v943, %v957
    %v990 = vcombine.low %v964, %v978
    %v991 = vcombine.high %v964, %v978
    %v992 = vcombine.low %v971, %v985
    %v993 = vcombine.high %v971, %v985
    %v995 = vunpack.c.l.s4 1966171168
    %v996 = vunpack.c.0.s8 %v995
    %v997 = vlaneseq
    %v998 = vshrl.u32 %v997, 7
    %v999 = vsub.s32 %v996, %v998
    %v1000 = vrot.slane %v986, %v999
    %v1002 = vunpack.c.l.s4 1966171168
    %v1003 = vunpack.c.0.s8 %v1002
    %v1004 = vlaneseq
    %v1005 = vshrl.u32 %v1004, 7
    %v1006 = vsub.s32 %v1003, %v1005
    %v1007 = vrot.slane %v988, %v1006
    %v1009 = vunpack.c.l.s4 1966171168
    %v1010 = vunpack.c.0.s8 %v1009
    %v1011 = vlaneseq
    %v1012 = vshrl.u32 %v1011, 7
    %v1013 = vsub.s32 %v1010, %v1012
    %v1014 = vrot.slane %v987, %v1013
    %v1016 = vunpack.c.l.s4 1966171168
    %v1017 = vunpack.c.0.s8 %v1016
    %v1018 = vlaneseq
    %v1019 = vshrl.u32 %v1018, 7
    %v1020 = vsub.s32 %v1017, %v1019
    %v1021 = vrot.slane %v989, %v1020
    %v1023 = vunpack.c.l.s4 1966171168
    %v1024 = vunpack.c.0.s8 %v1023
    %v1025 = vlaneseq
    %v1026 = vshrl.u32 %v1025, 7
    %v1027 = vsub.s32 %v1024, %v1026
    %v1028 = vrot.slane %v990, %v1027
    %v1030 = vunpack.c.l.s4 1966171168
    %v1031 = vunpack.c.0.s8 %v1030
    %v1032 = vlaneseq
    %v1033 = vshrl.u32 %v1032, 7
    %v1034 = vsub.s32 %v1031, %v1033
    %v1035 = vrot.slane %v992, %v1034
    %v1037 = vunpack.c.l.s4 1966171168
    %v1038 = vunpack.c.0.s8 %v1037
    %v1039 = vlaneseq
    %v1040 = vshrl.u32 %v1039, 7
    %v1041 = vsub.s32 %v1038, %v1040
    %v1042 = vrot.slane %v991, %v1041
    %v1044 = vunpack.c.l.s4 1966171168
    %v1045 = vunpack.c.0.s8 %v1044
    %v1046 = vlaneseq
    %v1047 = vshrl.u32 %v1046, 7
    %v1048 = vsub.s32 %v1045, %v1047
    %v1049 = vrot.slane %v993, %v1048
    %v1050 = vcombine.low %v1000, %v1028
    %v1051 = vcombine.high %v1000, %v1028
    %v1052 = vcombine.low %v1007, %v1035
    %v1053 = vcombine.low %v1014, %v1042
    %v1054 = vcombine.high %v1014, %v1042
    %v1055 = vcombine.low %v1021, %v1049
    %v1056 = vcombine.low %v84, %v85
    %v1057 = vcombine.high %v84, %v85
    %v1058 = vcombine.low %v86, %v87
    %v1059 = vcombine.high %v86, %v87
    %v1060 = vcombine.low %v88, %v89
    %v1061 = vcombine.high %v88, %v89
    %v1062 = vcombine.low %v90, %v91
    %v1063 = vcombine.high %v90, %v91
    %v1065 = vunpack.c.l.s4 1966171168
    %v1066 = vunpack.c.0.s8 %v1065
    %v1067 = vlaneseq
    %v1068 = vshrl.u32 %v1067, 7
    %v1069 = vsub.s32 %v1066, %v1068
    %v1070 = vrot.slane %v1056, %v1069
    %v1072 = vunpack.c.l.s4 1966171168
    %v1073 = vunpack.c.0.s8 %v1072
    %v1074 = vlaneseq
    %v1075 = vshrl.u32 %v1074, 7
    %v1076 = vsub.s32 %v1073, %v1075
    %v1077 = vrot.slane %v1057, %v1076
    %v1079 = vunpack.c.l.s4 1966171168
    %v1080 = vunpack.c.0.s8 %v1079
    %v1081 = vlaneseq
    %v1082 = vshrl.u32 %v1081, 7
    %v1083 = vsub.s32 %v1080, %v1082
    %v1084 = vrot.slane %v1058, %v1083
    %v1086 = vunpack.c.l.s4 1966171168
    %v1087 = vunpack.c.0.s8 %v1086
    %v1088 = vlaneseq
    %v1089 = vshrl.u32 %v1088, 7
    %v1090 = vsub.s32 %v1087, %v1089
    %v1091 = vrot.slane %v1059, %v1090
    %v1093 = vunpack.c.l.s4 1966171168
    %v1094 = vunpack.c.0.s8 %v1093
    %v1095 = vlaneseq
    %v1096 = vshrl.u32 %v1095, 7
    %v1097 = vsub.s32 %v1094, %v1096
    %v1098 = vrot.slane %v1060, %v1097
    %v1100 = vunpack.c.l.s4 1966171168
    %v1101 = vunpack.c.0.s8 %v1100
    %v1102 = vlaneseq
    %v1103 = vshrl.u32 %v1102, 7
    %v1104 = vsub.s32 %v1101, %v1103
    %v1105 = vrot.slane %v1061, %v1104
    %v1107 = vunpack.c.l.s4 1966171168
    %v1108 = vunpack.c.0.s8 %v1107
    %v1109 = vlaneseq
    %v1110 = vshrl.u32 %v1109, 7
    %v1111 = vsub.s32 %v1108, %v1110
    %v1112 = vrot.slane %v1062, %v1111
    %v1114 = vunpack.c.l.s4 1966171168
    %v1115 = vunpack.c.0.s8 %v1114
    %v1116 = vlaneseq
    %v1117 = vshrl.u32 %v1116, 7
    %v1118 = vsub.s32 %v1115, %v1117
    %v1119 = vrot.slane %v1063, %v1118
    %v1120 = vcombine.low %v1070, %v1084
    %v1121 = vcombine.high %v1070, %v1084
    %v1122 = vcombine.low %v1077, %v1091
    %v1123 = vcombine.high %v1077, %v1091
    %v1124 = vcombine.low %v1098, %v1112
    %v1125 = vcombine.high %v1098, %v1112
    %v1126 = vcombine.low %v1105, %v1119
    %v1127 = vcombine.high %v1105, %v1119
    %v1129 = vunpack.c.l.s4 1966171168
    %v1130 = vunpack.c.0.s8 %v1129
    %v1131 = vlaneseq
    %v1132 = vshrl.u32 %v1131, 7
    %v1133 = vsub.s32 %v1130, %v1132
    %v1134 = vrot.slane %v1120, %v1133
    %v1136 = vunpack.c.l.s4 1966171168
    %v1137 = vunpack.c.0.s8 %v1136
    %v1138 = vlaneseq
    %v1139 = vshrl.u32 %v1138, 7
    %v1140 = vsub.s32 %v1137, %v1139
    %v1141 = vrot.slane %v1122, %v1140
    %v1143 = vunpack.c.l.s4 1966171168
    %v1144 = vunpack.c.0.s8 %v1143
    %v1145 = vlaneseq
    %v1146 = vshrl.u32 %v1145, 7
    %v1147 = vsub.s32 %v1144, %v1146
    %v1148 = vrot.slane %v1121, %v1147
    %v1150 = vunpack.c.l.s4 1966171168
    %v1151 = vunpack.c.0.s8 %v1150
    %v1152 = vlaneseq
    %v1153 = vshrl.u32 %v1152, 7
    %v1154 = vsub.s32 %v1151, %v1153
    %v1155 = vrot.slane %v1123, %v1154
    %v1157 = vunpack.c.l.s4 1966171168
    %v1158 = vunpack.c.0.s8 %v1157
    %v1159 = vlaneseq
    %v1160 = vshrl.u32 %v1159, 7
    %v1161 = vsub.s32 %v1158, %v1160
    %v1162 = vrot.slane %v1124, %v1161
    %v1164 = vunpack.c.l.s4 1966171168
    %v1165 = vunpack.c.0.s8 %v1164
    %v1166 = vlaneseq
    %v1167 = vshrl.u32 %v1166, 7
    %v1168 = vsub.s32 %v1165, %v1167
    %v1169 = vrot.slane %v1126, %v1168
    %v1171 = vunpack.c.l.s4 1966171168
    %v1172 = vunpack.c.0.s8 %v1171
    %v1173 = vlaneseq
    %v1174 = vshrl.u32 %v1173, 7
    %v1175 = vsub.s32 %v1172, %v1174
    %v1176 = vrot.slane %v1125, %v1175
    %v1178 = vunpack.c.l.s4 1966171168
    %v1179 = vunpack.c.0.s8 %v1178
    %v1180 = vlaneseq
    %v1181 = vshrl.u32 %v1180, 7
    %v1182 = vsub.s32 %v1179, %v1181
    %v1183 = vrot.slane %v1127, %v1182
    %v1184 = vcombine.low %v1134, %v1162
    %v1185 = vcombine.high %v1134, %v1162
    %v1186 = vcombine.low %v1141, %v1169
    %v1187 = vcombine.low %v1148, %v1176
    %v1188 = vcombine.high %v1148, %v1176
    %v1189 = vcombine.low %v1155, %v1183
    %v1190 = vcombine.low %v92, %v93
    %v1191 = vcombine.high %v92, %v93
    %v1192 = vcombine.low %v94, %v95
    %v1193 = vcombine.high %v94, %v95
    %v1194 = vcombine.low %v96, %v97
    %v1195 = vcombine.high %v96, %v97
    %v1196 = vcombine.low %v98, %v99
    %v1197 = vcombine.high %v98, %v99
    %v1199 = vunpack.c.l.s4 1966171168
    %v1200 = vunpack.c.0.s8 %v1199
    %v1201 = vlaneseq
    %v1202 = vshrl.u32 %v1201, 7
    %v1203 = vsub.s32 %v1200, %v1202
    %v1204 = vrot.slane %v1190, %v1203
    %v1206 = vunpack.c.l.s4 1966171168
    %v1207 = vunpack.c.0.s8 %v1206
    %v1208 = vlaneseq
    %v1209 = vshrl.u32 %v1208, 7
    %v1210 = vsub.s32 %v1207, %v1209
    %v1211 = vrot.slane %v1191, %v1210
    %v1213 = vunpack.c.l.s4 1966171168
    %v1214 = vunpack.c.0.s8 %v1213
    %v1215 = vlaneseq
    %v1216 = vshrl.u32 %v1215, 7
    %v1217 = vsub.s32 %v1214, %v1216
    %v1218 = vrot.slane %v1192, %v1217
    %v1220 = vunpack.c.l.s4 1966171168
    %v1221 = vunpack.c.0.s8 %v1220
    %v1222 = vlaneseq
    %v1223 = vshrl.u32 %v1222, 7
    %v1224 = vsub.s32 %v1221, %v1223
    %v1225 = vrot.slane %v1193, %v1224
    %v1227 = vunpack.c.l.s4 1966171168
    %v1228 = vunpack.c.0.s8 %v1227
    %v1229 = vlaneseq
    %v1230 = vshrl.u32 %v1229, 7
    %v1231 = vsub.s32 %v1228, %v1230
    %v1232 = vrot.slane %v1194, %v1231
    %v1234 = vunpack.c.l.s4 1966171168
    %v1235 = vunpack.c.0.s8 %v1234
    %v1236 = vlaneseq
    %v1237 = vshrl.u32 %v1236, 7
    %v1238 = vsub.s32 %v1235, %v1237
    %v1239 = vrot.slane %v1195, %v1238
    %v1241 = vunpack.c.l.s4 1966171168
    %v1242 = vunpack.c.0.s8 %v1241
    %v1243 = vlaneseq
    %v1244 = vshrl.u32 %v1243, 7
    %v1245 = vsub.s32 %v1242, %v1244
    %v1246 = vrot.slane %v1196, %v1245
    %v1248 = vunpack.c.l.s4 1966171168
    %v1249 = vunpack.c.0.s8 %v1248
    %v1250 = vlaneseq
    %v1251 = vshrl.u32 %v1250, 7
    %v1252 = vsub.s32 %v1249, %v1251
    %v1253 = vrot.slane %v1197, %v1252
    %v1254 = vcombine.low %v1204, %v1218
    %v1255 = vcombine.high %v1204, %v1218
    %v1256 = vcombine.low %v1211, %v1225
    %v1257 = vcombine.high %v1211, %v1225
    %v1258 = vcombine.low %v1232, %v1246
    %v1259 = vcombine.high %v1232, %v1246
    %v1260 = vcombine.low %v1239, %v1253
    %v1261 = vcombine.high %v1239, %v1253
    %v1263 = vunpack.c.l.s4 1966171168
    %v1264 = vunpack.c.0.s8 %v1263
    %v1265 = vlaneseq
    %v1266 = vshrl.u32 %v1265, 7
    %v1267 = vsub.s32 %v1264, %v1266
    %v1268 = vrot.slane %v1254, %v1267
    %v1270 = vunpack.c.l.s4 1966171168
    %v1271 = vunpack.c.0.s8 %v1270
    %v1272 = vlaneseq
    %v1273 = vshrl.u32 %v1272, 7
    %v1274 = vsub.s32 %v1271, %v1273
    %v1275 = vrot.slane %v1256, %v1274
    %v1277 = vunpack.c.l.s4 1966171168
    %v1278 = vunpack.c.0.s8 %v1277
    %v1279 = vlaneseq
    %v1280 = vshrl.u32 %v1279, 7
    %v1281 = vsub.s32 %v1278, %v1280
    %v1282 = vrot.slane %v1255, %v1281
    %v1284 = vunpack.c.l.s4 1966171168
    %v1285 = vunpack.c.0.s8 %v1284
    %v1286 = vlaneseq
    %v1287 = vshrl.u32 %v1286, 7
    %v1288 = vsub.s32 %v1285, %v1287
    %v1289 = vrot.slane %v1257, %v1288
    %v1291 = vunpack.c.l.s4 1966171168
    %v1292 = vunpack.c.0.s8 %v1291
    %v1293 = vlaneseq
    %v1294 = vshrl.u32 %v1293, 7
    %v1295 = vsub.s32 %v1292, %v1294
    %v1296 = vrot.slane %v1258, %v1295
    %v1298 = vunpack.c.l.s4 1966171168
    %v1299 = vunpack.c.0.s8 %v1298
    %v1300 = vlaneseq
    %v1301 = vshrl.u32 %v1300, 7
    %v1302 = vsub.s32 %v1299, %v1301
    %v1303 = vrot.slane %v1260, %v1302
    %v1305 = vunpack.c.l.s4 1966171168
    %v1306 = vunpack.c.0.s8 %v1305
    %v1307 = vlaneseq
    %v1308 = vshrl.u32 %v1307, 7
    %v1309 = vsub.s32 %v1306, %v1308
    %v1310 = vrot.slane %v1259, %v1309
    %v1312 = vunpack.c.l.s4 1966171168
    %v1313 = vunpack.c.0.s8 %v1312
    %v1314 = vlaneseq
    %v1315 = vshrl.u32 %v1314, 7
    %v1316 = vsub.s32 %v1313, %v1315
    %v1317 = vrot.slane %v1261, %v1316
    %v1318 = vcombine.low %v1268, %v1296
    %v1319 = vcombine.high %v1268, %v1296
    %v1320 = vcombine.low %v1275, %v1303
    %v1321 = vcombine.low %v1282, %v1310
    %v1322 = vcombine.high %v1282, %v1310
    %v1323 = vcombine.low %v1289, %v1317
    %v1445 = vunpack.c.l.b16 %v100
    %v1446 = vunpack.c.l.b16 %v101
    %v1447 = vunpack.c.l.b16 %v102
    %v1448 = vunpack.c.l.b16 %v103
    %v1449 = vunpack.c.l.b16 %v104
    %v1450 = vunpack.c.l.b16 %v105
    %v1451 = vunpack.c.l.b16 %v106
    %v1452 = vunpack.c.l.b16 %v107
    %v1453 = vunpack.c.l.b16 %v108
    %v1454 = vunpack.c.l.b16 %v109
    %v1455 = vunpack.c.l.b16 %v110
    %v1456 = vunpack.c.l.b16 %v111
    %v1457 = vunpack.c.l.b16 %v112
    %v1458 = vunpack.c.l.b16 %v113
    %v1459 = vunpack.c.l.b16 %v114
    %v1460 = vunpack.c.l.b16 %v115
    %v1461 = vunpack.c.l.b16 %v116
    %v1462 = vunpack.c.l.b16 %v117
    %v1463 = vunpack.c.l.b16 %v118
    %v1464 = vunpack.c.l.b16 %v119
    %v1465 = vunpack.c.l.b16 %v120
    %v1466 = vunpack.c.l.b16 %v121
    %v1467 = vunpack.c.l.b16 %v122
    %v1468 = vunpack.c.l.b16 %v123
    %v1469 = vunpack.c.l.b16 %v124
    %v1470 = vunpack.c.l.b16 %v125
    %v1471 = vunpack.c.l.b16 %v126
    %v1472 = vunpack.c.l.b16 %v127
    %v1473 = vunpack.c.l.b16 %v128
    %v1474 = vunpack.c.l.b16 %v129
    %v1475 = vunpack.c.l.b16 %v130
    %v1476 = vunpack.c.l.b16 %v131
    %v1477 = vunpack.c.l.b16 %v132
    %v1478 = vunpack.c.l.b16 %v133
    %v1479 = vunpack.c.l.b16 %v134
    %v1480 = vunpack.c.l.b16 %v135
    %v1481 = vunpack.c.l.b16 %v136
    %v1482 = vunpack.c.l.b16 %v137
    %v1483 = vunpack.c.l.b16 %v138
    %v1484 = vunpack.c.l.b16 %v139
    %v1485 = vunpack.c.l.b16 %v140
    %v1486 = vunpack.c.l.b16 %v141
    %v1487 = vunpack.c.l.b16 %v142
    %v1488 = vunpack.c.l.b16 %v143
    %v1489 = vunpack.c.l.b16 %v144
    %v1490 = vunpack.c.l.b16 %v145
    %v1491 = vunpack.c.l.b16 %v146
    %v1492 = vunpack.c.l.b16 %v147
    %v1493 = vunpack.c.l.b16 %v148
    %v1494 = vunpack.c.l.b16 %v149
    %v1495 = vunpack.c.l.b16 %v150
    %v1496 = vunpack.c.l.b16 %v151
    %v1497 = vunpack.c.l.b16 %v152
    %v1498 = vunpack.c.l.b16 %v153
    %v1499 = vunpack.c.l.b16 %v154
    %v1500 = vunpack.c.l.b16 %v155
    %v1501 = vunpack.c.l.b16 %v156
    %v1502 = vunpack.c.l.b16 %v157
    %v1503 = vunpack.c.l.b16 %v158
    %v1504 = vunpack.c.l.b16 %v159
    %v1505 = vunpack.c.l.b16 %v160
    %v1506 = vunpack.c.l.b16 %v161
    %v1507 = vunpack.c.l.b16 %v162
    %v1508 = vunpack.c.l.b16 %v163
    %v1509 = vunpack.c.l.b16 %v164
    %v1510 = vunpack.c.l.b16 %v165
    %v1511 = vunpack.c.l.b16 %v166
    %v1512 = vunpack.c.l.b16 %v167
    %v1513 = vunpack.c.l.b16 %v168
    %v1514 = vunpack.c.l.b16 %v169
    %v1515 = vunpack.c.l.b16 %v170
    %v1516 = vunpack.c.l.b16 %v171
    %v1517 = vunpack.c.l.b16 %v172
    %v1518 = vunpack.c.l.b16 %v173
    %v1519 = vunpack.c.l.b16 %v174
    %v1520 = vunpack.c.l.b16 %v175
    %v1521 = vunpack.c.l.b16 %v176
    %v1522 = vunpack.c.l.b16 %v177
    %v1523 = vunpack.c.l.b16 %v178
    %v1524 = vunpack.c.l.b16 %v179
    %v1525 = vunpack.c.l.b16 %v180
    %v1526 = vpack.c.b16 %v1446, %v1445
    %v1527 = vpack.c.b16 %v1448, %v1447
    %v1528 = vpack.c.b16 %v1450, %v1449
    %v1529 = vpack.c.b16 %v1452, %v1451
    %v1530 = vpack.c.b16 %v1454, %v1453
    %v1531 = vpack.c.b16 %v1456, %v1455
    %v1532 = vpack.c.b16 %v1458, %v1457
    %v1533 = vpack.c.b16 %v1460, %v1459
    %v1534 = vpack.c.b16 %v1462, %v1461
    %v1535 = vpack.c.b16 %v1464, %v1463
    %v1536 = vpack.c.b16 %v1466, %v1465
    %v1537 = vpack.c.b16 %v1468, %v1467
    %v1538 = vpack.c.b16 %v1470, %v1469
    %v1539 = vpack.c.b16 %v1472, %v1471
    %v1540 = vpack.c.b16 %v1474, %v1473
    %v1541 = vpack.c.b16 %v1476, %v1475
    %v1542 = vpack.c.b16 %v1478, %v1477
    %v1543 = vpack.c.b16 %v1480, %v1479
    %v1544 = vpack.c.b16 %v1482, %v1481
    %v1545 = vpack.c.b16 %v1484, %v1483
    %v1546 = vpack.c.b16 %v1486, %v1485
    %v1547 = vpack.c.b16 %v1488, %v1487
    %v1548 = vpack.c.b16 %v1490, %v1489
    %v1549 = vpack.c.b16 %v1492, %v1491
    %v1550 = vpack.c.b16 %v1494, %v1493
    %v1551 = vpack.c.b16 %v1496, %v1495
    %v1552 = vpack.c.b16 %v1498, %v1497
    %v1553 = vpack.c.b16 %v1500, %v1499
    %v1554 = vpack.c.b16 %v1502, %v1501
    %v1555 = vpack.c.b16 %v1504, %v1503
    %v1556 = vpack.c.b16 %v1506, %v1505
    %v1557 = vpack.c.b16 %v1508, %v1507
    %v1558 = vpack.c.b16 %v1510, %v1509
    %v1559 = vpack.c.b16 %v1512, %v1511
    %v1560 = vpack.c.b16 %v1514, %v1513
    %v1561 = vpack.c.b16 %v1516, %v1515
    %v1562 = vpack.c.b16 %v1518, %v1517
    %v1563 = vpack.c.b16 %v1520, %v1519
    %v1564 = vpack.c.b16 %v1522, %v1521
    %v1565 = vpack.c.b16 %v1524, %v1523
    %v1566 = vpack.c.b16 %v1525, %v1525
    %vm1607 = vcmask 7168
    %v1609 = vsel %vm1607, %v385, 0
    %v1612 = vsel %vm1607, %v519, 0
    %v1615 = vsel %vm1607, %v653, 0
    %v1618 = vsel %vm1607, %v787, 0
    %v1621 = vsel %vm1607, %v921, 0
    %v1624 = vsel %vm1607, %v1055, 0
    %v1627 = vsel %vm1607, %v1189, 0
    %v1630 = vsel %vm1607, %v1323, 0
    %vm1632 = vcmask 1040384
    %v1633 = vsel 0, 4294967295, 65535
    %v1634 = vsel %vm1632, %v1633, 0
    %v1636 = vand.u32 %v1566, %v1634
    %1638 = vmatprep.subr.bf16.mxu0 0
    %1639 = vmatpush1.bf16.msra.mxu0 %v1526
    %1640 = vmatprep.subr.bf16.mxu0 0
    %1641 = vmatpush1.bf16.msra.mxu0 %v1527
    %1642 = vmatprep.subr.bf16.mxu0 0
    %1643 = vmatpush1.bf16.msra.mxu0 %v1528
    %1644 = vmatprep.subr.bf16.mxu0 0
    %1645 = vmatpush1.bf16.msra.mxu0 %v1529
    %1646 = vmatprep.subr.bf16.mxu0 0
    %1647 = vmatpush1.bf16.msra.mxu0 %v1530
    %1648 = vmatprep.subr.bf16.mxu0 0
    %1649 = vmatpush1.bf16.msra.mxu0 %v1531
    %1650 = vmatprep.subr.bf16.mxu0 0
    %1651 = vmatpush1.bf16.msra.mxu0 %v1532
    %1652 = vmatprep.subr.bf16.mxu0 0
    %1653 = vmatpush1.bf16.msra.mxu0 %v1533
    %1654 = vmatprep.subr.bf16.mxu0 0
    %1655 = vmatpush1.bf16.msra.mxu0 %v1534
    %1656 = vmatprep.subr.bf16.mxu0 0
    %1657 = vmatpush1.bf16.msra.mxu0 %v1535
    %1658 = vmatprep.subr.bf16.mxu0 0
    %1659 = vmatpush1.bf16.msra.mxu0 %v1536
    %1660 = vmatprep.subr.bf16.mxu0 0
    %1661 = vmatpush1.bf16.msra.mxu0 %v1537
    %1662 = vmatprep.subr.bf16.mxu0 0
    %1663 = vmatpush1.bf16.msra.mxu0 %v1538
    %1664 = vmatprep.subr.bf16.mxu0 0
    %1665 = vmatpush1.bf16.msra.mxu0 %v1539
    %1666 = vmatprep.subr.bf16.mxu0 0
    %1667 = vmatpush1.bf16.msra.mxu0 %v1540
    %1668 = vmatprep.subr.bf16.mxu0 0
    %1669 = vmatpush1.bf16.msra.mxu0 %v1541
    %1670 = vmatprep.mubr.bf16.mxu0 %v383
    %1671 = vmatmul.mubr.bf16.gmra.mrb[0].mxu0 %v380
    %v1672 = vpop.f32.mrb[0].mxu0
    %v1673 = vadd.f32 %v186, %v1672
    %v1674 = vpop.f32.mrb[0].mxu0
    %v1675 = vpop.f32.mrb[0].mxu0
    %v1676 = vadd.f32 %v186, %v1675
    %v1677 = vpop.f32.mrb[0].mxu0
    %1678 = vmatprep.mubr.bf16.mxu0 %v517
    %1679 = vmatmul.mubr.bf16.gmra.mrb[0].mxu0 %v514
    %v1680 = vpop.f32.mrb[0].mxu0
    %v1681 = vadd.f32 %v186, %v1680
    %v1682 = vpop.f32.mrb[0].mxu0
    %v1683 = vpop.f32.mrb[0].mxu0
    %v1684 = vadd.f32 %v186, %v1683
    %v1685 = vpop.f32.mrb[0].mxu0
    %1686 = vmatprep.mubr.bf16.mxu0 %v651
    %1687 = vmatmul.mubr.bf16.gmra.mrb[0].mxu0 %v648
    %v1688 = vpop.f32.mrb[0].mxu0
    %v1689 = vadd.f32 %v186, %v1688
    %v1690 = vpop.f32.mrb[0].mxu0
    %v1691 = vpop.f32.mrb[0].mxu0
    %v1692 = vadd.f32 %v186, %v1691
    %v1693 = vpop.f32.mrb[0].mxu0
    %1694 = vmatprep.mubr.bf16.mxu0 %v785
    %1695 = vmatmul.mubr.bf16.gmra.mrb[0].mxu0 %v782
    %v1696 = vpop.f32.mrb[0].mxu0
    %v1697 = vadd.f32 %v186, %v1696
    %v1698 = vpop.f32.mrb[0].mxu0
    %v1699 = vpop.f32.mrb[0].mxu0
    %v1700 = vadd.f32 %v186, %v1699
    %v1701 = vpop.f32.mrb[0].mxu0
    %1702 = vmatprep.mubr.bf16.mxu0 %v919
    %1703 = vmatmul.mubr.bf16.gmra.mrb[0].mxu0 %v916
    %v1704 = vpop.f32.mrb[0].mxu0
    %v1705 = vadd.f32 %v186, %v1704
    %v1706 = vpop.f32.mrb[0].mxu0
    %v1707 = vpop.f32.mrb[0].mxu0
    %v1708 = vadd.f32 %v186, %v1707
    %v1709 = vpop.f32.mrb[0].mxu0
    %1710 = vmatprep.mubr.bf16.mxu0 %v1053
    %1711 = vmatmul.mubr.bf16.gmra.mrb[0].mxu0 %v1050
    %v1712 = vpop.f32.mrb[0].mxu0
    %v1713 = vadd.f32 %v186, %v1712
    %v1714 = vpop.f32.mrb[0].mxu0
    %v1715 = vpop.f32.mrb[0].mxu0
    %v1716 = vadd.f32 %v186, %v1715
    %v1717 = vpop.f32.mrb[0].mxu0
    %1718 = vmatprep.mubr.bf16.mxu0 %v1187
    %1719 = vmatmul.mubr.bf16.gmra.mrb[0].mxu0 %v1184
    %v1720 = vpop.f32.mrb[0].mxu0
    %v1721 = vadd.f32 %v186, %v1720
    %v1722 = vpop.f32.mrb[0].mxu0
    %v1723 = vpop.f32.mrb[0].mxu0
    %v1724 = vadd.f32 %v186, %v1723
    %v1725 = vpop.f32.mrb[0].mxu0
    %1726 = vmatprep.mubr.bf16.mxu0 %v1321
    %1727 = vmatmul.mubr.bf16.gmra.mrb[0].mxu0 %v1318
    %v1728 = vpop.f32.mrb[0].mxu0
    %v1729 = vadd.f32 %v186, %v1728
    %v1730 = vpop.f32.mrb[0].mxu0
    %v1731 = vpop.f32.mrb[0].mxu0
    %v1732 = vadd.f32 %v186, %v1731
    %v1733 = vpop.f32.mrb[0].mxu0
    %1734 = vdwg.mxu0
    %1735 = vmatprep.subr.bf16.mxu0 0
    %1736 = vmatpush1.bf16.msra.mxu0 %v1542
    %1737 = vmatprep.subr.bf16.mxu0 0
    %1738 = vmatpush1.bf16.msra.mxu0 %v1543
    %1739 = vmatprep.subr.bf16.mxu0 0
    %1740 = vmatpush1.bf16.msra.mxu0 %v1544
    %1741 = vmatprep.subr.bf16.mxu0 0
    %1742 = vmatpush1.bf16.msra.mxu0 %v1545
    %1743 = vmatprep.subr.bf16.mxu0 0
    %1744 = vmatpush1.bf16.msra.mxu0 %v1546
    %1745 = vmatprep.subr.bf16.mxu0 0
    %1746 = vmatpush1.bf16.msra.mxu0 %v1547
    %1747 = vmatprep.subr.bf16.mxu0 0
    %1748 = vmatpush1.bf16.msra.mxu0 %v1548
    %1749 = vmatprep.subr.bf16.mxu0 0
    %1750 = vmatpush1.bf16.msra.mxu0 %v1549
    %1751 = vmatprep.subr.bf16.mxu0 0
    %1752 = vmatpush1.bf16.msra.mxu0 %v1550
    %1753 = vmatprep.subr.bf16.mxu0 0
    %1754 = vmatpush1.bf16.msra.mxu0 %v1551
    %1755 = vmatprep.subr.bf16.mxu0 0
    %1756 = vmatpush1.bf16.msra.mxu0 %v1552
    %1757 = vmatprep.subr.bf16.mxu0 0
    %1758 = vmatpush1.bf16.msra.mxu0 %v1553
    %1759 = vmatprep.subr.bf16.mxu0 0
    %1760 = vmatpush1.bf16.msra.mxu0 %v1554
    %1761 = vmatprep.subr.bf16.mxu0 0
    %1762 = vmatpush1.bf16.msra.mxu0 %v1555
    %1763 = vmatprep.subr.bf16.mxu0 0
    %1764 = vmatpush1.bf16.msra.mxu0 %v1556
    %1765 = vmatprep.subr.bf16.mxu0 0
    %1766 = vmatpush1.bf16.msra.mxu0 %v1557
    %1767 = vmatprep.mubr.bf16.mxu0 %v384
    %1768 = vmatmul.mubr.bf16.gmra.mrb[0].mxu0 %v381
    %v1769 = vpop.f32.mrb[0].mxu0
    %v1770 = vadd.f32 %v1673, %v1769
    %v1771 = vpop.f32.mrb[0].mxu0
    %v1772 = vpop.f32.mrb[0].mxu0
    %v1773 = vadd.f32 %v1676, %v1772
    %v1774 = vpop.f32.mrb[0].mxu0
    %1775 = vmatprep.mubr.bf16.mxu0 %v518
    %1776 = vmatmul.mubr.bf16.gmra.mrb[0].mxu0 %v515
    %v1777 = vpop.f32.mrb[0].mxu0
    %v1778 = vadd.f32 %v1681, %v1777
    %v1779 = vpop.f32.mrb[0].mxu0
    %v1780 = vpop.f32.mrb[0].mxu0
    %v1781 = vadd.f32 %v1684, %v1780
    %v1782 = vpop.f32.mrb[0].mxu0
    %1783 = vmatprep.mubr.bf16.mxu0 %v652
    %1784 = vmatmul.mubr.bf16.gmra.mrb[0].mxu0 %v649
    %v1785 = vpop.f32.mrb[0].mxu0
    %v1786 = vadd.f32 %v1689, %v1785
    %v1787 = vpop.f32.mrb[0].mxu0
    %v1788 = vpop.f32.mrb[0].mxu0
    %v1789 = vadd.f32 %v1692, %v1788
    %v1790 = vpop.f32.mrb[0].mxu0
    %1791 = vmatprep.mubr.bf16.mxu0 %v786
    %1792 = vmatmul.mubr.bf16.gmra.mrb[0].mxu0 %v783
    %v1793 = vpop.f32.mrb[0].mxu0
    %v1794 = vadd.f32 %v1697, %v1793
    %v1795 = vpop.f32.mrb[0].mxu0
    %v1796 = vpop.f32.mrb[0].mxu0
    %v1797 = vadd.f32 %v1700, %v1796
    %v1798 = vpop.f32.mrb[0].mxu0
    %1799 = vmatprep.mubr.bf16.mxu0 %v920
    %1800 = vmatmul.mubr.bf16.gmra.mrb[0].mxu0 %v917
    %v1801 = vpop.f32.mrb[0].mxu0
    %v1802 = vadd.f32 %v1705, %v1801
    %v1803 = vpop.f32.mrb[0].mxu0
    %v1804 = vpop.f32.mrb[0].mxu0
    %v1805 = vadd.f32 %v1708, %v1804
    %v1806 = vpop.f32.mrb[0].mxu0
    %1807 = vmatprep.mubr.bf16.mxu0 %v1054
    %1808 = vmatmul.mubr.bf16.gmra.mrb[0].mxu0 %v1051
    %v1809 = vpop.f32.mrb[0].mxu0
    %v1810 = vadd.f32 %v1713, %v1809
    %v1811 = vpop.f32.mrb[0].mxu0
    %v1812 = vpop.f32.mrb[0].mxu0
    %v1813 = vadd.f32 %v1716, %v1812
    %v1814 = vpop.f32.mrb[0].mxu0
    %1815 = vmatprep.mubr.bf16.mxu0 %v1188
    %1816 = vmatmul.mubr.bf16.gmra.mrb[0].mxu0 %v1185
    %v1817 = vpop.f32.mrb[0].mxu0
    %v1818 = vadd.f32 %v1721, %v1817
    %v1819 = vpop.f32.mrb[0].mxu0
    %v1820 = vpop.f32.mrb[0].mxu0
    %v1821 = vadd.f32 %v1724, %v1820
    %v1822 = vpop.f32.mrb[0].mxu0
    %1823 = vmatprep.mubr.bf16.mxu0 %v1322
    %1824 = vmatmul.mubr.bf16.gmra.mrb[0].mxu0 %v1319
    %v1825 = vpop.f32.mrb[0].mxu0
    %v1826 = vadd.f32 %v1729, %v1825
    %v1827 = vpop.f32.mrb[0].mxu0
    %v1828 = vpop.f32.mrb[0].mxu0
    %v1829 = vadd.f32 %v1732, %v1828
    %v1830 = vpop.f32.mrb[0].mxu0
    %1831 = vdwg.mxu0
    %1832 = vmatprep.subr.bf16.mxu0 0
    %1833 = vmatpush1.bf16.msra.mxu0 %v1558
    %1834 = vmatprep.subr.bf16.mxu0 0
    %1835 = vmatpush1.bf16.msra.mxu0 %v1559
    %1836 = vmatprep.subr.bf16.mxu0 0
    %1837 = vmatpush1.bf16.msra.mxu0 %v1560
    %1838 = vmatprep.subr.bf16.mxu0 0
    %1839 = vmatpush1.bf16.msra.mxu0 %v1561
    %1840 = vmatprep.subr.bf16.mxu0 0
    %1841 = vmatpush1.bf16.msra.mxu0 %v1562
    %1842 = vmatprep.subr.bf16.mxu0 0
    %1843 = vmatpush1.bf16.msra.mxu0 %v1563
    %1844 = vmatprep.subr.bf16.mxu0 0
    %1845 = vmatpush1.bf16.msra.mxu0 %v1564
    %1846 = vmatprep.subr.bf16.mxu0 0
    %1847 = vmatpush1.bf16.msra.mxu0 %v1565
    %1848 = vmatprep.subr.bf16.mxu0 0
    %1849 = vmatpush1.bf16.msra.mxu0 %v1636
    %1850 = vmatprep.subr.bf16.mxu0 0
    %1851 = vmatpush1.bf16.msra.mxu0 0
    %1852 = vmatprep.subr.bf16.mxu0 0
    %1853 = vmatpush1.bf16.msra.mxu0 0
    %1854 = vmatprep.subr.bf16.mxu0 0
    %1855 = vmatpush1.bf16.msra.mxu0 0
    %1856 = vmatprep.subr.bf16.mxu0 0
    %1857 = vmatpush1.bf16.msra.mxu0 0
    %1858 = vmatprep.subr.bf16.mxu0 0
    %1859 = vmatpush1.bf16.msra.mxu0 0
    %1860 = vmatprep.subr.bf16.mxu0 0
    %1861 = vmatpush1.bf16.msra.mxu0 0
    %1862 = vmatprep.subr.bf16.mxu0 0
    %1863 = vmatpush1.bf16.msra.mxu0 0
    %1864 = vmatprep.mubr.bf16.mxu0 %v1609
    %1865 = vmatmul.mubr.bf16.gmra.mrb[0].mxu0 %v382
    %v1866 = vpop.f32.mrb[0].mxu0
    %v1867 = vadd.f32 %v1770, %v1866
    %v1868 = vpop.f32.mrb[0].mxu0
    %v1869 = vpop.f32.mrb[0].mxu0
    %v1870 = vadd.f32 %v1773, %v1869
    %v1871 = vpop.f32.mrb[0].mxu0
    %1872 = vmatprep.mubr.bf16.mxu0 %v1612
    %1873 = vmatmul.mubr.bf16.gmra.mrb[0].mxu0 %v516
    %v1874 = vpop.f32.mrb[0].mxu0
    %v1875 = vadd.f32 %v1778, %v1874
    %v1876 = vpop.f32.mrb[0].mxu0
    %v1877 = vpop.f32.mrb[0].mxu0
    %v1878 = vadd.f32 %v1781, %v1877
    %v1879 = vpop.f32.mrb[0].mxu0
    %1880 = vmatprep.mubr.bf16.mxu0 %v1615
    %1881 = vmatmul.mubr.bf16.gmra.mrb[0].mxu0 %v650
    %v1882 = vpop.f32.mrb[0].mxu0
    %v1883 = vadd.f32 %v1786, %v1882
    %v1884 = vpop.f32.mrb[0].mxu0
    %v1885 = vpop.f32.mrb[0].mxu0
    %v1886 = vadd.f32 %v1789, %v1885
    %v1887 = vpop.f32.mrb[0].mxu0
    %1888 = vmatprep.mubr.bf16.mxu0 %v1618
    %1889 = vmatmul.mubr.bf16.gmra.mrb[0].mxu0 %v784
    %v1890 = vpop.f32.mrb[0].mxu0
    %v1891 = vadd.f32 %v1794, %v1890
    %v1892 = vpop.f32.mrb[0].mxu0
    %v1893 = vpop.f32.mrb[0].mxu0
    %v1894 = vadd.f32 %v1797, %v1893
    %v1895 = vpop.f32.mrb[0].mxu0
    %1896 = vmatprep.mubr.bf16.mxu0 %v1621
    %1897 = vmatmul.mubr.bf16.gmra.mrb[0].mxu0 %v918
    %v1898 = vpop.f32.mrb[0].mxu0
    %v1899 = vadd.f32 %v1802, %v1898
    %v1900 = vpop.f32.mrb[0].mxu0
    %v1901 = vpop.f32.mrb[0].mxu0
    %v1902 = vadd.f32 %v1805, %v1901
    %v1903 = vpop.f32.mrb[0].mxu0
    %1904 = vmatprep.mubr.bf16.mxu0 %v1624
    %1905 = vmatmul.mubr.bf16.gmra.mrb[0].mxu0 %v1052
    %v1906 = vpop.f32.mrb[0].mxu0
    %v1907 = vadd.f32 %v1810, %v1906
    %v1908 = vpop.f32.mrb[0].mxu0
    %v1909 = vpop.f32.mrb[0].mxu0
    %v1910 = vadd.f32 %v1813, %v1909
    %v1911 = vpop.f32.mrb[0].mxu0
    %1912 = vmatprep.mubr.bf16.mxu0 %v1627
    %1913 = vmatmul.mubr.bf16.gmra.mrb[0].mxu0 %v1186
    %v1914 = vpop.f32.mrb[0].mxu0
    %v1915 = vadd.f32 %v1818, %v1914
    %v1916 = vpop.f32.mrb[0].mxu0
    %v1917 = vpop.f32.mrb[0].mxu0
    %v1918 = vadd.f32 %v1821, %v1917
    %v1919 = vpop.f32.mrb[0].mxu0
    %1920 = vmatprep.mubr.bf16.mxu0 %v1630
    %1921 = vmatmul.mubr.bf16.gmra.mrb[0].mxu0 %v1320
    %v1922 = vpop.f32.mrb[0].mxu0
    %v1923 = vadd.f32 %v1826, %v1922
    %v1924 = vpop.f32.mrb[0].mxu0
    %v1925 = vpop.f32.mrb[0].mxu0
    %v1926 = vadd.f32 %v1829, %v1925
    %v1927 = vpop.f32.mrb[0].mxu0
    %1928 = vdwg.mxu0
    %v1929 = vmax.f32 %v1867, 0.0
    %v1930 = vmax.f32 %v1870, 0.0
    %v1931 = vmax.f32 %v1875, 0.0
    %v1932 = vmax.f32 %v1878, 0.0
    %v1933 = vmax.f32 %v1883, 0.0
    %v1934 = vmax.f32 %v1886, 0.0
    %v1935 = vmax.f32 %v1891, 0.0
    %v1936 = vmax.f32 %v1894, 0.0
    %v1937 = vmax.f32 %v1899, 0.0
    %v1938 = vmax.f32 %v1902, 0.0
    %v1939 = vmax.f32 %v1907, 0.0
    %v1940 = vmax.f32 %v1910, 0.0
    %v1941 = vmax.f32 %v1915, 0.0
    %v1942 = vmax.f32 %v1918, 0.0
    %v1943 = vmax.f32 %v1923, 0.0
    %v1944 = vmax.f32 %v1926, 0.0
    %v1945 = vld [vmem:[%s1] sm:$0xff]
    %v1946 = vld [vmem:[%s1 + $0x8] sm:$0xff]
    %v1947 = vld [vmem:[%s1 + $0x10] sm:$0xff]
    %v1948 = vld [vmem:[%s1 + $0x18] sm:$0xff]
    %v1949 = vld [vmem:[%s1 + $0x20] sm:$0xff]
    %v1950 = vld [vmem:[%s1 + $0x28] sm:$0xff]
    %v1951 = vld [vmem:[%s1 + $0x30] sm:$0xff]
    %v1952 = vld [vmem:[%s1 + $0x38] sm:$0xff]
    %v1953 = vld [vmem:[%s1 + $0x40] sm:$0xff]
    %v1954 = vld [vmem:[%s1 + $0x48] sm:$0xff]
    %v1955 = vld [vmem:[%s1 + $0x50] sm:$0xff]
    %v1956 = vld [vmem:[%s1 + $0x58] sm:$0xff]
    %v1957 = vld [vmem:[%s1 + $0x60] sm:$0xff]
    %v1958 = vld [vmem:[%s1 + $0x68] sm:$0xff]
    %v1959 = vld [vmem:[%s1 + $0x70] sm:$0xff]
    %v1960 = vld [vmem:[%s1 + $0x78] sm:$0xff]
    %v1961 = vld [vmem:[%s4] sm:$0xff]
    %v1962 = vld [vmem:[%s4 + $0x8] sm:$0xff]
    %v1963 = vld [vmem:[%s5] sm:$0xff]
    %v1964 = vld [vmem:[%s5 + $0x8] sm:$0xff]
    %v1965 = vld [vmem:[%s5 + $0x10] sm:$0x3]
    %vm1966 = vcmask 146432
    %v1968 = vsel %vm1966, %v1945, 0
    %v1971 = vsel %vm1966, %v1946, 0
    %v1974 = vsel %vm1966, %v1947, 0
    %v1977 = vsel %vm1966, %v1948, 0
    %v1980 = vsel %vm1966, %v1949, 0
    %v1983 = vsel %vm1966, %v1950, 0
    %v1986 = vsel %vm1966, %v1951, 0
    %v1989 = vsel %vm1966, %v1952, 0
    %v1992 = vsel %vm1966, %v1953, 0
    %v1995 = vsel %vm1966, %v1954, 0
    %v1998 = vsel %vm1966, %v1955, 0
    %v2001 = vsel %vm1966, %v1956, 0
    %v2004 = vsel %vm1966, %v1957, 0
    %v2007 = vsel %vm1966, %v1958, 0
    %v2010 = vsel %vm1966, %v1959, 0
    %v2013 = vsel %vm1966, %v1960, 0
    %vm2015 = vcmask 1041408
    %v2017 = vsel %vm2015, %v1965, 0
    %2019 = vmatprep.subr.mxu0 0.0
    %2020 = vmatpush1.msra.mxu0 %v1963
    %2021 = vmatprep.subr.mxu0 0.0
    %2022 = vmatpush1.msra.mxu0 %v1964
    %2023 = vmatprep.subr.mxu0 0.0
    %2024 = vmatpush1.msra.mxu0 %v2017
    %2025 = vmatprep.subr.mxu0 0.0
    %2026 = vmatpush1.msra.mxu0 0.0
    %2027 = vmatprep.subr.mxu0 0.0
    %2028 = vmatpush1.msra.mxu0 0.0
    %2029 = vmatprep.subr.mxu0 0.0
    %2030 = vmatpush1.msra.mxu0 0.0
    %2031 = vmatprep.subr.mxu0 0.0
    %2032 = vmatpush1.msra.mxu0 0.0
    %2033 = vmatprep.subr.mxu0 0.0
    %2034 = vmatpush1.msra.mxu0 0.0
    %2035 = vmatprep.subr.mxu0 0.0
    %2036 = vmatpush1.msra.mxu0 0.0
    %2037 = vmatprep.subr.mxu0 0.0
    %2038 = vmatpush1.msra.mxu0 0.0
    %2039 = vmatprep.subr.mxu0 0.0
    %2040 = vmatpush1.msra.mxu0 0.0
    %2041 = vmatprep.subr.mxu0 0.0
    %2042 = vmatpush1.msra.mxu0 0.0
    %2043 = vmatprep.subr.mxu0 0.0
    %2044 = vmatpush1.msra.mxu0 0.0
    %2045 = vmatprep.subr.mxu0 0.0
    %2046 = vmatpush1.msra.mxu0 0.0
    %2047 = vmatprep.subr.mxu0 0.0
    %2048 = vmatpush1.msra.mxu0 0.0
    %2049 = vmatprep.subr.mxu0 0.0
    %2050 = vmatpush1.msra.mxu0 0.0
    %2051 = vmatprep.subr.mxu0 0.0
    %2052 = vmatpush1.msra.mxu0 0.0
    %2053 = vmatprep.subr.mxu0 0.0
    %2054 = vmatpush1.msra.mxu0 0.0
    %2055 = vmatprep.subr.mxu0 0.0
    %2056 = vmatpush1.msra.mxu0 0.0
    %2057 = vmatprep.subr.mxu0 0.0
    %2058 = vmatpush1.msra.mxu0 0.0
    %2059 = vmatprep.subr.mxu0 0.0
    %2060 = vmatpush1.msra.mxu0 0.0
    %2061 = vmatprep.subr.mxu0 0.0
    %2062 = vmatpush1.msra.mxu0 0.0
    %2063 = vmatprep.subr.mxu0 0.0
    %2064 = vmatpush1.msra.mxu0 0.0
    %2065 = vmatprep.subr.mxu0 0.0
    %2066 = vmatpush1.msra.mxu0 0.0
    %2067 = vmatprep.subr.mxu0 0.0
    %2068 = vmatpush1.msra.mxu0 0.0
    %2069 = vmatprep.subr.mxu0 0.0
    %2070 = vmatpush1.msra.mxu0 0.0
    %2071 = vmatprep.subr.mxu0 0.0
    %2072 = vmatpush1.msra.mxu0 0.0
    %2073 = vmatprep.subr.mxu0 0.0
    %2074 = vmatpush1.msra.mxu0 0.0
    %2075 = vmatprep.subr.mxu0 0.0
    %2076 = vmatpush1.msra.mxu0 0.0
    %2077 = vmatprep.subr.mxu0 0.0
    %2078 = vmatpush1.msra.mxu0 0.0
    %2079 = vmatprep.subr.mxu0 0.0
    %2080 = vmatpush1.msra.mxu0 0.0
    %2081 = vmatprep.subr.mxu0 0.0
    %2082 = vmatpush1.msra.mxu0 0.0
    %2083 = vmatprep.mubr.f32.mxu0 0.0
    %2084 = vmatmul.mubr.f32.gmra.mrb[0].mxu0 %v1968
    %v2085 = vpop.f32.mrb[0].mxu0
    %v2086 = vadd.f32 0.0, %v2085
    %v2087 = vpop.f32.mrb[0].mxu0
    %2088 = vmatprep.mubr.f32.mxu0 0.0
    %2089 = vmatmul.mubr.f32.gmra.mrb[0].mxu0 %v1971
    %v2090 = vpop.f32.mrb[0].mxu0
    %v2091 = vadd.f32 0.0, %v2090
    %v2092 = vpop.f32.mrb[0].mxu0
    %2093 = vmatprep.mubr.f32.mxu0 0.0
    %2094 = vmatmul.mubr.f32.gmra.mrb[0].mxu0 %v1974
    %v2095 = vpop.f32.mrb[0].mxu0
    %v2096 = vadd.f32 0.0, %v2095
    %v2097 = vpop.f32.mrb[0].mxu0
    %2098 = vmatprep.mubr.f32.mxu0 0.0
    %2099 = vmatmul.mubr.f32.gmra.mrb[0].mxu0 %v1977
    %v2100 = vpop.f32.mrb[0].mxu0
    %v2101 = vadd.f32 0.0, %v2100
    %v2102 = vpop.f32.mrb[0].mxu0
    %2103 = vmatprep.mubr.f32.mxu0 0.0
    %2104 = vmatmul.mubr.f32.gmra.mrb[0].mxu0 %v1980
    %v2105 = vpop.f32.mrb[0].mxu0
    %v2106 = vadd.f32 0.0, %v2105
    %v2107 = vpop.f32.mrb[0].mxu0
    %2108 = vmatprep.mubr.f32.mxu0 0.0
    %2109 = vmatmul.mubr.f32.gmra.mrb[0].mxu0 %v1983
    %v2110 = vpop.f32.mrb[0].mxu0
    %v2111 = vadd.f32 0.0, %v2110
    %v2112 = vpop.f32.mrb[0].mxu0
    %2113 = vmatprep.mubr.f32.mxu0 0.0
    %2114 = vmatmul.mubr.f32.gmra.mrb[0].mxu0 %v1986
    %v2115 = vpop.f32.mrb[0].mxu0
    %v2116 = vadd.f32 0.0, %v2115
    %v2117 = vpop.f32.mrb[0].mxu0
    %2118 = vmatprep.mubr.f32.mxu0 0.0
    %2119 = vmatmul.mubr.f32.gmra.mrb[0].mxu0 %v1989
    %v2120 = vpop.f32.mrb[0].mxu0
    %v2121 = vadd.f32 0.0, %v2120
    %v2122 = vpop.f32.mrb[0].mxu0
    %2123 = vmatprep.mubr.f32.mxu0 0.0
    %2124 = vmatmul.mubr.f32.gmra.mrb[0].mxu0 %v1992
    %v2125 = vpop.f32.mrb[0].mxu0
    %v2126 = vadd.f32 0.0, %v2125
    %v2127 = vpop.f32.mrb[0].mxu0
    %2128 = vmatprep.mubr.f32.mxu0 0.0
    %2129 = vmatmul.mubr.f32.gmra.mrb[0].mxu0 %v1995
    %v2130 = vpop.f32.mrb[0].mxu0
    %v2131 = vadd.f32 0.0, %v2130
    %v2132 = vpop.f32.mrb[0].mxu0
    %2133 = vmatprep.mubr.f32.mxu0 0.0
    %2134 = vmatmul.mubr.f32.gmra.mrb[0].mxu0 %v1998
    %v2135 = vpop.f32.mrb[0].mxu0
    %v2136 = vadd.f32 0.0, %v2135
    %v2137 = vpop.f32.mrb[0].mxu0
    %2138 = vmatprep.mubr.f32.mxu0 0.0
    %2139 = vmatmul.mubr.f32.gmra.mrb[0].mxu0 %v2001
    %v2140 = vpop.f32.mrb[0].mxu0
    %v2141 = vadd.f32 0.0, %v2140
    %v2142 = vpop.f32.mrb[0].mxu0
    %2143 = vmatprep.mubr.f32.mxu0 0.0
    %2144 = vmatmul.mubr.f32.gmra.mrb[0].mxu0 %v2004
    %v2145 = vpop.f32.mrb[0].mxu0
    %v2146 = vadd.f32 0.0, %v2145
    %v2147 = vpop.f32.mrb[0].mxu0
    %2148 = vmatprep.mubr.f32.mxu0 0.0
    %2149 = vmatmul.mubr.f32.gmra.mrb[0].mxu0 %v2007
    %v2150 = vpop.f32.mrb[0].mxu0
    %v2151 = vadd.f32 0.0, %v2150
    %v2152 = vpop.f32.mrb[0].mxu0
    %2153 = vmatprep.mubr.f32.mxu0 0.0
    %2154 = vmatmul.mubr.f32.gmra.mrb[0].mxu0 %v2010
    %v2155 = vpop.f32.mrb[0].mxu0
    %v2156 = vadd.f32 0.0, %v2155
    %v2157 = vpop.f32.mrb[0].mxu0
    %2158 = vmatprep.mubr.f32.mxu0 0.0
    %2159 = vmatmul.mubr.f32.gmra.mrb[0].mxu0 %v2013
    %v2160 = vpop.f32.mrb[0].mxu0
    %v2161 = vadd.f32 0.0, %v2160
    %v2162 = vpop.f32.mrb[0].mxu0
    %2163 = vdwg.mxu0
    %vm2164 = vcmask 130048
    %v2166 = vsel %vm2164, %v1929, 0
    %v2169 = vsel %vm2164, %v1930, 0
    %v2172 = vsel %vm2164, %v1931, 0
    %v2175 = vsel %vm2164, %v1932, 0
    %v2178 = vsel %vm2164, %v1933, 0
    %v2181 = vsel %vm2164, %v1934, 0
    %v2184 = vsel %vm2164, %v1935, 0
    %v2187 = vsel %vm2164, %v1936, 0
    %v2190 = vsel %vm2164, %v1937, 0
    %v2193 = vsel %vm2164, %v1938, 0
    %v2196 = vsel %vm2164, %v1939, 0
    %v2199 = vsel %vm2164, %v1940, 0
    %v2202 = vsel %vm2164, %v1941, 0
    %v2205 = vsel %vm2164, %v1942, 0
    %v2208 = vsel %vm2164, %v1943, 0
    %v2211 = vsel %vm2164, %v1944, 0
    %2213 = vmatprep.subr.mxu0 0.0
    %2214 = vmatpush1.msra.mxu0 %v1961
    %2215 = vmatprep.subr.mxu0 0.0
    %2216 = vmatpush1.msra.mxu0 %v1962
    %2217 = vmatprep.subr.mxu0 0.0
    %2218 = vmatpush1.msra.mxu0 0.0
    %2219 = vmatprep.subr.mxu0 0.0
    %2220 = vmatpush1.msra.mxu0 0.0
    %2221 = vmatprep.subr.mxu0 0.0
    %2222 = vmatpush1.msra.mxu0 0.0
    %2223 = vmatprep.subr.mxu0 0.0
    %2224 = vmatpush1.msra.mxu0 0.0
    %2225 = vmatprep.subr.mxu0 0.0
    %2226 = vmatpush1.msra.mxu0 0.0
    %2227 = vmatprep.subr.mxu0 0.0
    %2228 = vmatpush1.msra.mxu0 0.0
    %2229 = vmatprep.subr.mxu0 0.0
    %2230 = vmatpush1.msra.mxu0 0.0
    %2231 = vmatprep.subr.mxu0 0.0
    %2232 = vmatpush1.msra.mxu0 0.0
    %2233 = vmatprep.subr.mxu0 0.0
    %2234 = vmatpush1.msra.mxu0 0.0
    %2235 = vmatprep.subr.mxu0 0.0
    %2236 = vmatpush1.msra.mxu0 0.0
    %2237 = vmatprep.subr.mxu0 0.0
    %2238 = vmatpush1.msra.mxu0 0.0
    %2239 = vmatprep.subr.mxu0 0.0
    %2240 = vmatpush1.msra.mxu0 0.0
    %2241 = vmatprep.subr.mxu0 0.0
    %2242 = vmatpush1.msra.mxu0 0.0
    %2243 = vmatprep.subr.mxu0 0.0
    %2244 = vmatpush1.msra.mxu0 0.0
    %2245 = vmatprep.subr.mxu0 0.0
    %2246 = vmatpush1.msra.mxu0 0.0
    %2247 = vmatprep.subr.mxu0 0.0
    %2248 = vmatpush1.msra.mxu0 0.0
    %2249 = vmatprep.subr.mxu0 0.0
    %2250 = vmatpush1.msra.mxu0 0.0
    %2251 = vmatprep.subr.mxu0 0.0
    %2252 = vmatpush1.msra.mxu0 0.0
    %2253 = vmatprep.subr.mxu0 0.0
    %2254 = vmatpush1.msra.mxu0 0.0
    %2255 = vmatprep.subr.mxu0 0.0
    %2256 = vmatpush1.msra.mxu0 0.0
    %2257 = vmatprep.subr.mxu0 0.0
    %2258 = vmatpush1.msra.mxu0 0.0
    %2259 = vmatprep.subr.mxu0 0.0
    %2260 = vmatpush1.msra.mxu0 0.0
    %2261 = vmatprep.subr.mxu0 0.0
    %2262 = vmatpush1.msra.mxu0 0.0
    %2263 = vmatprep.subr.mxu0 0.0
    %2264 = vmatpush1.msra.mxu0 0.0
    %2265 = vmatprep.subr.mxu0 0.0
    %2266 = vmatpush1.msra.mxu0 0.0
    %2267 = vmatprep.subr.mxu0 0.0
    %2268 = vmatpush1.msra.mxu0 0.0
    %2269 = vmatprep.subr.mxu0 0.0
    %2270 = vmatpush1.msra.mxu0 0.0
    %2271 = vmatprep.subr.mxu0 0.0
    %2272 = vmatpush1.msra.mxu0 0.0
    %2273 = vmatprep.subr.mxu0 0.0
    %2274 = vmatpush1.msra.mxu0 0.0
    %2275 = vmatprep.subr.mxu0 0.0
    %2276 = vmatpush1.msra.mxu0 0.0
    %2277 = vmatprep.mubr.f32.mxu0 0.0
    %2278 = vmatmul.mubr.f32.gmra.mrb[0].mxu0 %v2166
    %v2279 = vpop.f32.mrb[0].mxu0
    %v2280 = vadd.f32 %v2086, %v2279
    %v2281 = vpop.f32.mrb[0].mxu0
    %2282 = vmatprep.mubr.f32.mxu0 0.0
    %2283 = vmatmul.mubr.f32.gmra.mrb[0].mxu0 %v2169
    %v2284 = vpop.f32.mrb[0].mxu0
    %v2285 = vadd.f32 %v2091, %v2284
    %v2286 = vpop.f32.mrb[0].mxu0
    %2287 = vmatprep.mubr.f32.mxu0 0.0
    %2288 = vmatmul.mubr.f32.gmra.mrb[0].mxu0 %v2172
    %v2289 = vpop.f32.mrb[0].mxu0
    %v2290 = vadd.f32 %v2096, %v2289
    %v2291 = vpop.f32.mrb[0].mxu0
    %2292 = vmatprep.mubr.f32.mxu0 0.0
    %2293 = vmatmul.mubr.f32.gmra.mrb[0].mxu0 %v2175
    %v2294 = vpop.f32.mrb[0].mxu0
    %v2295 = vadd.f32 %v2101, %v2294
    %v2296 = vpop.f32.mrb[0].mxu0
    %2297 = vmatprep.mubr.f32.mxu0 0.0
    %2298 = vmatmul.mubr.f32.gmra.mrb[0].mxu0 %v2178
    %v2299 = vpop.f32.mrb[0].mxu0
    %v2300 = vadd.f32 %v2106, %v2299
    %v2301 = vpop.f32.mrb[0].mxu0
    %2302 = vmatprep.mubr.f32.mxu0 0.0
    %2303 = vmatmul.mubr.f32.gmra.mrb[0].mxu0 %v2181
    %v2304 = vpop.f32.mrb[0].mxu0
    %v2305 = vadd.f32 %v2111, %v2304
    %v2306 = vpop.f32.mrb[0].mxu0
    %2307 = vmatprep.mubr.f32.mxu0 0.0
    %2308 = vmatmul.mubr.f32.gmra.mrb[0].mxu0 %v2184
    %v2309 = vpop.f32.mrb[0].mxu0
    %v2310 = vadd.f32 %v2116, %v2309
    %v2311 = vpop.f32.mrb[0].mxu0
    %2312 = vmatprep.mubr.f32.mxu0 0.0
    %2313 = vmatmul.mubr.f32.gmra.mrb[0].mxu0 %v2187
    %v2314 = vpop.f32.mrb[0].mxu0
    %v2315 = vadd.f32 %v2121, %v2314
    %v2316 = vpop.f32.mrb[0].mxu0
    %2317 = vmatprep.mubr.f32.mxu0 0.0
    %2318 = vmatmul.mubr.f32.gmra.mrb[0].mxu0 %v2190
    %v2319 = vpop.f32.mrb[0].mxu0
    %v2320 = vadd.f32 %v2126, %v2319
    %v2321 = vpop.f32.mrb[0].mxu0
    %2322 = vmatprep.mubr.f32.mxu0 0.0
    %2323 = vmatmul.mubr.f32.gmra.mrb[0].mxu0 %v2193
    %v2324 = vpop.f32.mrb[0].mxu0
    %v2325 = vadd.f32 %v2131, %v2324
    %v2326 = vpop.f32.mrb[0].mxu0
    %2327 = vmatprep.mubr.f32.mxu0 0.0
    %2328 = vmatmul.mubr.f32.gmra.mrb[0].mxu0 %v2196
    %v2329 = vpop.f32.mrb[0].mxu0
    %v2330 = vadd.f32 %v2136, %v2329
    %v2331 = vpop.f32.mrb[0].mxu0
    %2332 = vmatprep.mubr.f32.mxu0 0.0
    %2333 = vmatmul.mubr.f32.gmra.mrb[0].mxu0 %v2199
    %v2334 = vpop.f32.mrb[0].mxu0
    %v2335 = vadd.f32 %v2141, %v2334
    %v2336 = vpop.f32.mrb[0].mxu0
    %2337 = vmatprep.mubr.f32.mxu0 0.0
    %2338 = vmatmul.mubr.f32.gmra.mrb[0].mxu0 %v2202
    %v2339 = vpop.f32.mrb[0].mxu0
    %v2340 = vadd.f32 %v2146, %v2339
    %v2341 = vpop.f32.mrb[0].mxu0
    %2342 = vmatprep.mubr.f32.mxu0 0.0
    %2343 = vmatmul.mubr.f32.gmra.mrb[0].mxu0 %v2205
    %v2344 = vpop.f32.mrb[0].mxu0
    %v2345 = vadd.f32 %v2151, %v2344
    %v2346 = vpop.f32.mrb[0].mxu0
    %2347 = vmatprep.mubr.f32.mxu0 0.0
    %2348 = vmatmul.mubr.f32.gmra.mrb[0].mxu0 %v2208
    %v2349 = vpop.f32.mrb[0].mxu0
    %v2350 = vadd.f32 %v2156, %v2349
    %v2351 = vpop.f32.mrb[0].mxu0
    %2352 = vmatprep.mubr.f32.mxu0 0.0
    %2353 = vmatmul.mubr.f32.gmra.mrb[0].mxu0 %v2211
    %v2354 = vpop.f32.mrb[0].mxu0
    %v2355 = vadd.f32 %v2161, %v2354
    %v2356 = vpop.f32.mrb[0].mxu0
    %2357 = vdwg.mxu0
    %v2358 = vld [vmem:[%s6] sm:$0x1]
    %v2360 = vlaneseq
    %v2361 = vshrl.u32 %v2360, 7
    %v2362 = vsub.s32 0, %v2361
    %v2363 = vrot.slane %v2358, %v2362
    %v2365 = vadd.f32 %v2280, %v2363
    %v2366 = vadd.f32 %v2285, %v2363
    %v2367 = vadd.f32 %v2290, %v2363
    %v2368 = vadd.f32 %v2295, %v2363
    %v2369 = vadd.f32 %v2300, %v2363
    %v2370 = vadd.f32 %v2305, %v2363
    %v2371 = vadd.f32 %v2310, %v2363
    %v2372 = vadd.f32 %v2315, %v2363
    %v2373 = vadd.f32 %v2320, %v2363
    %v2374 = vadd.f32 %v2325, %v2363
    %v2375 = vadd.f32 %v2330, %v2363
    %v2376 = vadd.f32 %v2335, %v2363
    %v2377 = vadd.f32 %v2340, %v2363
    %v2378 = vadd.f32 %v2345, %v2363
    %v2379 = vadd.f32 %v2350, %v2363
    %v2380 = vadd.f32 %v2355, %v2363
    %v2381 = vmax.f32 %v2365, 0.0
    %v2382 = vmax.f32 %v2366, 0.0
    %v2383 = vmax.f32 %v2367, 0.0
    %v2384 = vmax.f32 %v2368, 0.0
    %v2385 = vmax.f32 %v2369, 0.0
    %v2386 = vmax.f32 %v2370, 0.0
    %v2387 = vmax.f32 %v2371, 0.0
    %v2388 = vmax.f32 %v2372, 0.0
    %v2389 = vmax.f32 %v2373, 0.0
    %v2390 = vmax.f32 %v2374, 0.0
    %v2391 = vmax.f32 %v2375, 0.0
    %v2392 = vmax.f32 %v2376, 0.0
    %v2393 = vmax.f32 %v2377, 0.0
    %v2394 = vmax.f32 %v2378, 0.0
    %v2395 = vmax.f32 %v2379, 0.0
    %v2396 = vmax.f32 %v2380, 0.0
    %v2397 = vld [vmem:[%s7] sm:$0x1]
    %v2398 = vld [vmem:[#allocation2] sm:$0x1]
    %2400 = vset.pattern.permute.xlu0 0
    %2401 = vperm.xlu0 %2400, %v2398
    %v2402 = vpop.permute.xlu0 %2401
    %v2404 = vlaneseq
    %v2405 = vshrl.u32 %v2404, 7
    %v2406 = vsub.s32 0, %v2405
    %v2407 = vrot.slane %v2402, %v2406
    %vm2408 = vcmask 523264
    %v2410 = vsel %vm2408, %v2397, 0
    %v2413 = vsel %vm2408, %v2381, 0
    %v2416 = vsel %vm2408, %v2382, 0
    %v2419 = vsel %vm2408, %v2383, 0
    %v2422 = vsel %vm2408, %v2384, 0
    %v2425 = vsel %vm2408, %v2385, 0
    %v2428 = vsel %vm2408, %v2386, 0
    %v2431 = vsel %vm2408, %v2387, 0
    %v2434 = vsel %vm2408, %v2388, 0
    %v2437 = vsel %vm2408, %v2389, 0
    %v2440 = vsel %vm2408, %v2390, 0
    %v2443 = vsel %vm2408, %v2391, 0
    %v2446 = vsel %vm2408, %v2392, 0
    %v2449 = vsel %vm2408, %v2393, 0
    %v2452 = vsel %vm2408, %v2394, 0
    %v2455 = vsel %vm2408, %v2395, 0
    %v2458 = vsel %vm2408, %v2396, 0
    %2460 = vmatprep.subr.mxu0 0.0
    %2461 = vmatpush1.xpose.msra.mxu0 %v2413
    %2462 = vmatprep.subr.mxu0 0.0
    %2463 = vmatpush1.xpose.msra.mxu0 %v2416
    %2464 = vmatprep.subr.mxu0 0.0
    %2465 = vmatpush1.xpose.msra.mxu0 %v2419
    %2466 = vmatprep.subr.mxu0 0.0
    %2467 = vmatpush1.xpose.msra.mxu0 %v2422
    %2468 = vmatprep.subr.mxu0 0.0
    %2469 = vmatpush1.xpose.msra.mxu0 %v2425
    %2470 = vmatprep.subr.mxu0 0.0
    %2471 = vmatpush1.xpose.msra.mxu0 %v2428
    %2472 = vmatprep.subr.mxu0 0.0
    %2473 = vmatpush1.xpose.msra.mxu0 %v2431
    %2474 = vmatprep.subr.mxu0 0.0
    %2475 = vmatpush1.xpose.msra.mxu0 %v2434
    %2476 = vmatprep.subr.mxu0 0.0
    %2477 = vmatpush1.xpose.msra.mxu0 %v2437
    %2478 = vmatprep.subr.mxu0 0.0
    %2479 = vmatpush1.xpose.msra.mxu0 %v2440
    %2480 = vmatprep.subr.mxu0 0.0
    %2481 = vmatpush1.xpose.msra.mxu0 %v2443
    %2482 = vmatprep.subr.mxu0 0.0
    %2483 = vmatpush1.xpose.msra.mxu0 %v2446
    %2484 = vmatprep.subr.mxu0 0.0
    %2485 = vmatpush1.xpose.msra.mxu0 %v2449
    %2486 = vmatprep.subr.mxu0 0.0
    %2487 = vmatpush1.xpose.msra.mxu0 %v2452
    %2488 = vmatprep.subr.mxu0 0.0
    %2489 = vmatpush1.xpose.msra.mxu0 %v2455
    %2490 = vmatprep.subr.mxu0 0.0
    %2491 = vmatpush1.xpose.msra.mxu0 %v2458
    %2492 = vmatprep.subr.mxu0 0.0
    %2493 = vmatpush1.xpose.msra.mxu0 0.0
    %2494 = vmatprep.subr.mxu0 0.0
    %2495 = vmatpush1.xpose.msra.mxu0 0.0
    %2496 = vmatprep.subr.mxu0 0.0
    %2497 = vmatpush1.xpose.msra.mxu0 0.0
    %2498 = vmatprep.subr.mxu0 0.0
    %2499 = vmatpush1.xpose.msra.mxu0 0.0
    %2500 = vmatprep.subr.mxu0 0.0
    %2501 = vmatpush1.xpose.msra.mxu0 0.0
    %2502 = vmatprep.subr.mxu0 0.0
    %2503 = vmatpush1.xpose.msra.mxu0 0.0
    %2504 = vmatprep.subr.mxu0 0.0
    %2505 = vmatpush1.xpose.msra.mxu0 0.0
    %2506 = vmatprep.subr.mxu0 0.0
    %2507 = vmatpush1.xpose.msra.mxu0 0.0
    %2508 = vmatprep.subr.mxu0 0.0
    %2509 = vmatpush1.xpose.msra.mxu0 0.0
    %2510 = vmatprep.subr.mxu0 0.0
    %2511 = vmatpush1.xpose.msra.mxu0 0.0
    %2512 = vmatprep.subr.mxu0 0.0
    %2513 = vmatpush1.xpose.msra.mxu0 0.0
    %2514 = vmatprep.subr.mxu0 0.0
    %2515 = vmatpush1.xpose.msra.mxu0 0.0
    %2516 = vmatprep.subr.mxu0 0.0
    %2517 = vmatpush1.xpose.msra.mxu0 0.0
    %2518 = vmatprep.subr.mxu0 0.0
    %2519 = vmatpush1.xpose.msra.mxu0 0.0
    %2520 = vmatprep.subr.mxu0 0.0
    %2521 = vmatpush1.xpose.msra.mxu0 0.0
    %2522 = vmatprep.subr.mxu0 0.0
    %2523 = vmatpush1.xpose.msra.mxu0 0.0
    %2524 = vmatprep.mubr.f32.mxu0 0.0
    %2525 = vmatmul.mubr.f32.gmra.mrb[0].mxu0 %v2410
    %v2526 = vpop.f32.mrb[0].mxu0
    %v2527 = vadd.f32 %v2407, %v2526
    %v2528 = vpop.f32.mrb[0].mxu0
    %2529 = vdwg.mxu0
    %2530 = vst [vmem:[#allocation3] sm:$0x1] %v2527
    // Predicated region
    $region38: #{tpu_custom_call.1} parent=1 // pred_check
      _
    $region39: #{tpu_custom_call.1} parent=1 // pred_check_branch
      %2532 = sbr.rel (0) target = $region41
    $region40: #{tpu_custom_call.1} parent=1 // pred_region
      %s2534 = ssub.s32 16, 16
      %2535 = vsyncadd [#allocation4], %s2534
      %s2537 = sshll.u32 [#allocation3], 4
      %s2538 = int_to_ptr.vmem [resolvable:$true] %s2537
      %2540 = dma.vmem_to_hbm [thread:$0]  %s2538, 16, %s9, [#allocation4]
    $region41: #{tpu_custom_call.1} parent=1 // pred_fallthru
      _
    // Predicated region
    $region42: #{tpu_custom_call.1} parent=1 // pred_check
      _
    $region43: #{tpu_custom_call.1} parent=1 // pred_check_branch
      %2542 = sbr.rel (0) target = $region45
    $region44: #{tpu_custom_call.1} parent=1 // pred_region
      %2543 = dma.done [#allocation4], 16
    $region45: #{tpu_custom_call.1} parent=1 // pred_fallthru
      _
    %2544 = vsyncpa [#allocation4], 1

</llo_original>
